<compile_context>
chip_gen: v5e
topology: v5e:2x2
jax: 0.10.0
libtpu: 0.0.40
codegen_flags: <defaults>
</compile_context>

<pallas_src>
import functools

import jax
import jax.numpy as jnp
from jax import lax
from jax.experimental import pallas as pl
from jax.experimental.pallas import tpu as pltpu

GROUPS = 32
EPS = 1e-5


def _resblock_kernel(x_ref, gmat_ref, gamma_ref, beta_ref, w_ref, bias_ref,
                     mask_ref, time_ref, wlin_ref, o_ref, *,
                     H, W, C, Cout, identity_skip):
    """One batch sample: GN1 -> SiLU -> 3x3 conv (+1x1 skip) + time embedding."""
    HW = H * W
    xv = x_ref[0].astype(jnp.float32)                              # (C, HW)

    # ---- GroupNorm (two-pass variance, f32) --------------------------------
    ch_sum = jnp.sum(xv, axis=1, keepdims=True)                    # (C, 1)
    mean_c = jnp.dot(gmat_ref[...], ch_sum,
                     preferred_element_type=jnp.float32)           # (C, 1) group mean
    xc = xv - mean_c
    sq_sum = jnp.sum(xc * xc, axis=1, keepdims=True)               # (C, 1)
    var_c = jnp.dot(gmat_ref[...], sq_sum,
                    preferred_element_type=jnp.float32)            # (C, 1) group var
    y = xc * lax.rsqrt(var_c + EPS) * gamma_ref[...] + beta_ref[...]

    # ---- SiLU ---------------------------------------------------------------
    y = y * jax.nn.sigmoid(y)                                      # (C, HW) f32

    # ---- 3x3 conv (+ folded 1x1 skip) as ONE bf16 MXU matmul ----------------
    taps = []
    for k in range(9):
        dh, dw = k // 3, k % 3
        off = (dh - 1) * W + (dw - 1)
        if off == 0:
            taps.append(y.astype(jnp.bfloat16))                    # center tap
        else:
            shifted = pltpu.roll(y, shift=(-off) % HW, axis=1)
            taps.append((shifted * mask_ref[k]).astype(jnp.bfloat16))
    if not identity_skip:
        taps.append(xv.astype(jnp.bfloat16))                       # 1x1 skip tap
    ybig = jnp.concatenate(taps, axis=0)                           # (KTOT*C, HW)

    acc = jnp.dot(w_ref[...], ybig,
                  preferred_element_type=jnp.float32)              # (Cout, HW)

    # ---- time embedding: Linear(silu(time)) ---------------------------------
    t = time_ref[0].astype(jnp.float32)                            # (1, n_time)
    t = t * jax.nn.sigmoid(t)
    emb = jnp.sum(wlin_ref[...] * t, axis=1, keepdims=True)        # (Cout, 1)

    out = acc + emb + bias_ref[...]
    if identity_skip:
        out = out + xv                                             # identity skip
    o_ref[0] = out.astype(o_ref.dtype)                             # lane-dense store


def unet_residual_block(x_nchw, time, gamma, beta, conv_w_hwio, conv_b,
                        lin_w, lin_b, skip_w=None, skip_b=None):
    """x_nchw: (N, C, H, W) f32; time: (N, n_time) f32.  Returns (N, Cout, H, W)."""
    N, C, H, W = x_nchw.shape
    Cout = conv_w_hwio.shape[-1]
    n_time = time.shape[-1]
    HW = H * W
    assert C % GROUPS == 0
    identity_skip = skip_w is None
    if identity_skip:
        assert C == Cout

    # NCHW kept throughout; only free reshapes (no transposes, no HBM round trips).
    x_flat = x_nchw.reshape(N, C, HW)
    time3 = time.reshape(N, 1, n_time)

    # (C, C) group-averaging matrix: gmat @ per-channel sums -> per-group means.
    Cg = C // GROUPS
    gidx = jnp.arange(C) // Cg
    gmat = (gidx[:, None] == gidx[None, :]).astype(jnp.float32) / float(Cg * HW)

    # Conv weights: HWIO (3,3,Cin,Cout) -> (Cout, 9*Cin), tap-major columns,
    # with the 1x1 skip conv appended as a 10th tap when present.  bf16 for MXU.
    w9 = conv_w_hwio.reshape(9, C, Cout)                       # [k, cin, cout]
    w_big = jnp.transpose(w9, (2, 0, 1)).reshape(Cout, 9 * C)  # [cout, k*C+cin]
    if not identity_skip:
        w_big = jnp.concatenate([w_big, skip_w], axis=1)       # (Cout, 10*C)
    w_big = w_big.astype(jnp.bfloat16)
    ktot = 9 if identity_skip else 10

    # Per-Cout bias: conv bias + linear bias (+ skip bias) folded together.
    bias_all = conv_b + lin_b
    if not identity_skip:
        bias_all = bias_all + skip_b
    bias_all = bias_all.reshape(Cout, 1).astype(jnp.float32)

    # Border-validity masks for the 9 taps, flattened over H*W (precomputed once).
    hh = jnp.arange(H)[:, None]
    ww = jnp.arange(W)[None, :]
    masks = []
    for k in range(9):
        dh, dw = k // 3, k % 3
        m = ((hh + dh - 1 >= 0) & (hh + dh - 1 < H) &
             (ww + dw - 1 >= 0) & (ww + dw - 1 < W))
        masks.append(m.reshape(1, HW))
    mask_arr = jnp.stack(masks, axis=0).astype(jnp.float32)    # (9, 1, HW)

    gamma2 = gamma.reshape(C, 1).astype(jnp.float32)
    beta2 = beta.reshape(C, 1).astype(jnp.float32)
    lin_w2 = lin_w.astype(jnp.float32)                         # (Cout, n_time)

    kernel = functools.partial(_resblock_kernel, H=H, W=W, C=C, Cout=Cout,
                               identity_skip=identity_skip)

    out_flat = pl.pallas_call(
        kernel,
        out_shape=jax.ShapeDtypeStruct((N, Cout, HW), x_nchw.dtype),
        grid_spec=pltpu.PrefetchScalarGridSpec(
            num_scalar_prefetch=0,
            grid=(N,),
            in_specs=[
                pl.BlockSpec((1, C, HW), lambda n: (n, 0, 0)),      # x (NCHW, flat)
                pl.BlockSpec((C, C), lambda n: (0, 0)),             # group matrix
                pl.BlockSpec((C, 1), lambda n: (0, 0)),             # gamma
                pl.BlockSpec((C, 1), lambda n: (0, 0)),             # beta
                pl.BlockSpec((Cout, ktot * C), lambda n: (0, 0)),   # conv(+skip) w
                pl.BlockSpec((Cout, 1), lambda n: (0, 0)),          # fused biases
                pl.BlockSpec((9, 1, HW), lambda n: (0, 0, 0)),      # tap masks
                pl.BlockSpec((1, 1, n_time), lambda n: (n, 0, 0)),  # time
                pl.BlockSpec((Cout, n_time), lambda n: (0, 0)),     # linear weight
            ],
            out_specs=pl.BlockSpec((1, Cout, HW), lambda n: (n, 0, 0)),
        ),
        compiler_params=pltpu.CompilerParams(
            dimension_semantics=("parallel",)),
    )(x_flat, gmat, gamma2, beta2, w_big, bias_all, mask_arr, time3, lin_w2)

    return out_flat.reshape(N, Cout, H, W)


def _reference(x, time, gamma, beta, conv_w_hwio, conv_b, lin_w, lin_b,
               skip_w, skip_b):
    N, C, H, W = x.shape
    Cg = C // GROUPS
    xg = x.reshape(N, GROUPS, Cg, H, W)
    mean = xg.mean(axis=(2, 3, 4), keepdims=True)
    var = xg.var(axis=(2, 3, 4), keepdims=True)
    xn = ((xg - mean) / jnp.sqrt(var + EPS)).reshape(N, C, H, W)
    xn = xn * gamma[None, :, None, None] + beta[None, :, None, None]
    h = xn * jax.nn.sigmoid(xn)
    h = lax.conv_general_dilated(h, conv_w_hwio, (1, 1), "SAME",
                                 dimension_numbers=("NCHW", "HWIO", "NCHW"))
    h = h + conv_b[None, :, None, None]
    ts = time * jax.nn.sigmoid(time)
    emb = ts @ lin_w.T + lin_b                                 # (N, Cout)
    merged = h + emb[:, :, None, None]
    if skip_w is not None:
        skip = jnp.einsum("oc,nchw->nohw", skip_w, x) + skip_b[None, :, None, None]
    else:
        skip = x
    return merged + skip


if __name__ == "__main__":
    N, C_in, C_out, H, W, N_TIME = 2, 64, 32, 16, 16, 128

    key = jax.random.PRNGKey(0)
    ks = jax.random.split(key, 10)

    x = jax.random.normal(ks[0], (N, C_in, H, W), dtype=jnp.float32)
    time = jax.random.normal(ks[1], (N, N_TIME), dtype=jnp.float32)
    gamma = 1.0 + 0.1 * jax.random.normal(ks[2], (C_in,), dtype=jnp.float32)
    beta = 0.1 * jax.random.normal(ks[3], (C_in,), dtype=jnp.float32)
    conv_w = 0.05 * jax.random.normal(ks[4], (3, 3, C_in, C_out), dtype=jnp.float32)  # HWIO
    conv_b = 0.05 * jax.random.normal(ks[5], (C_out,), dtype=jnp.float32)
    lin_w = 0.05 * jax.random.normal(ks[6], (C_out, N_TIME), dtype=jnp.float32)
    lin_b = 0.05 * jax.random.normal(ks[7], (C_out,), dtype=jnp.float32)
    skip_w = 0.05 * jax.random.normal(ks[8], (C_out, C_in), dtype=jnp.float32)  # 1x1 conv
    skip_b = 0.05 * jax.random.normal(ks[9], (C_out,), dtype=jnp.float32)

    out = unet_residual_block(x, time, gamma, beta, conv_w, conv_b,
                              lin_w, lin_b, skip_w, skip_b)
    out = jax.block_until_ready(out)

    ref = _reference(x, time, gamma, beta, conv_w, conv_b, lin_w, lin_b,
                     skip_w, skip_b)
    assert out.shape == (N, C_out, H, W)
    max_err = float(jnp.max(jnp.abs(out - ref)))
    assert jnp.allclose(out, ref, atol=2e-2, rtol=2e-2), max_err

    print("KERNEL_OK")
</pallas_src>

<mosaic_0001>
module attributes {stable_mosaic.version = 11 : i64} {
  func.func @_resblock_kernel(%arg0: i32, %arg1: memref<1x64x256xf32, #tpu.memory_space<vmem>>, %arg2: memref<64x64xf32, #tpu.memory_space<vmem>>, %arg3: memref<64x1xf32, #tpu.memory_space<vmem>>, %arg4: memref<64x1xf32, #tpu.memory_space<vmem>>, %arg5: memref<32x640xbf16, #tpu.memory_space<vmem>>, %arg6: memref<32x1xf32, #tpu.memory_space<vmem>>, %arg7: memref<9x1x256xf32, #tpu.memory_space<vmem>>, %arg8: memref<1x1x128xf32, #tpu.memory_space<vmem>>, %arg9: memref<32x128xf32, #tpu.memory_space<vmem>>, %arg10: memref<1x32x256xf32, #tpu.memory_space<vmem>>) attributes {dimension_semantics = [#tpu.dimension_semantics<parallel>], iteration_bounds = array<i64: 2>, scalar_prefetch = 0 : i64, scratch_operands = 0 : i64, tpu.core_type = #tpu.core_type<tc>, window_params = [{transform_indices = @transform_0, window_bounds = array<i64: 1, 64, 256>}, {pipeline_mode = #tpu.pipeline_mode<synchronous>, transform_indices = @transform_1, window_bounds = array<i64: 64, 64>}, {pipeline_mode = #tpu.pipeline_mode<synchronous>, transform_indices = @transform_2, window_bounds = array<i64: 64, 1>}, {pipeline_mode = #tpu.pipeline_mode<synchronous>, transform_indices = @transform_3, window_bounds = array<i64: 64, 1>}, {pipeline_mode = #tpu.pipeline_mode<synchronous>, transform_indices = @transform_4, window_bounds = array<i64: 32, 640>}, {pipeline_mode = #tpu.pipeline_mode<synchronous>, transform_indices = @transform_5, window_bounds = array<i64: 32, 1>}, {pipeline_mode = #tpu.pipeline_mode<synchronous>, transform_indices = @transform_6, window_bounds = array<i64: 9, 1, 256>}, {transform_indices = @transform_7, window_bounds = array<i64: 1, 1, 128>}, {pipeline_mode = #tpu.pipeline_mode<synchronous>, transform_indices = @transform_8, window_bounds = array<i64: 32, 128>}, {transform_indices = @transform_9, window_bounds = array<i64: 1, 32, 256>}]} {
    %c0 = arith.constant 0 : index
    %c0_0 = arith.constant 0 : index
    %c0_1 = arith.constant 0 : index
    %0 = vector.load %arg1[%c0, %c0_0, %c0_1] : memref<1x64x256xf32, #tpu.memory_space<vmem>>, vector<1x64x256xf32>
    %1 = vector.shape_cast %0 : vector<1x64x256xf32> to vector<64x256xf32>
    %cst = arith.constant dense<0.000000e+00> : vector<64xf32>
    %2 = vector.multi_reduction <add>, %1, %cst [1] : vector<64x256xf32> to vector<64xf32>
    %3 = vector.shape_cast %2 : vector<64xf32> to vector<64x1xf32>
    %c0_2 = arith.constant 0 : index
    %c0_3 = arith.constant 0 : index
    %4 = vector.load %arg2[%c0_2, %c0_3] : memref<64x64xf32, #tpu.memory_space<vmem>>, vector<64x64xf32>
    %cst_4 = arith.constant dense<0.000000e+00> : vector<64x1xf32>
    %5 = tpu.matmul %4, %3, %cst_4 {dimension_numbers = #tpu.dot_dimension_numbers<[1], [0], [0], [1], [0, 0, 1, 1], [], []>} : vector<64x64xf32>, vector<64x1xf32>, vector<64x1xf32> -> vector<64x1xf32>
    %6 = vector.broadcast %5 : vector<64x1xf32> to vector<64x256xf32>
    %7 = arith.subf %1, %6 : vector<64x256xf32>
    %8 = arith.mulf %7, %7 : vector<64x256xf32>
    %cst_5 = arith.constant dense<0.000000e+00> : vector<64xf32>
    %9 = vector.multi_reduction <add>, %8, %cst_5 [1] : vector<64x256xf32> to vector<64xf32>
    %10 = vector.shape_cast %9 : vector<64xf32> to vector<64x1xf32>
    %c0_6 = arith.constant 0 : index
    %c0_7 = arith.constant 0 : index
    %11 = vector.load %arg2[%c0_6, %c0_7] : memref<64x64xf32, #tpu.memory_space<vmem>>, vector<64x64xf32>
    %cst_8 = arith.constant dense<0.000000e+00> : vector<64x1xf32>
    %12 = tpu.matmul %11, %10, %cst_8 {dimension_numbers = #tpu.dot_dimension_numbers<[1], [0], [0], [1], [0, 0, 1, 1], [], []>} : vector<64x64xf32>, vector<64x1xf32>, vector<64x1xf32> -> vector<64x1xf32>
    %cst_9 = arith.constant 9.99999974E-6 : f32
    %13 = vector.broadcast %cst_9 : f32 to vector<64x1xf32>
    %14 = arith.addf %12, %13 : vector<64x1xf32>
    %15 = math.rsqrt %14 : vector<64x1xf32>
    %16 = vector.broadcast %15 : vector<64x1xf32> to vector<64x256xf32>
    %17 = arith.mulf %7, %16 : vector<64x256xf32>
    %c0_10 = arith.constant 0 : index
    %c0_11 = arith.constant 0 : index
    %18 = vector.load %arg3[%c0_10, %c0_11] : memref<64x1xf32, #tpu.memory_space<vmem>>, vector<64x1xf32>
    %19 = vector.broadcast %18 : vector<64x1xf32> to vector<64x256xf32>
    %20 = arith.mulf %17, %19 : vector<64x256xf32>
    %c0_12 = arith.constant 0 : index
    %c0_13 = arith.constant 0 : index
    %21 = vector.load %arg4[%c0_12, %c0_13] : memref<64x1xf32, #tpu.memory_space<vmem>>, vector<64x1xf32>
    %22 = vector.broadcast %21 : vector<64x1xf32> to vector<64x256xf32>
    %23 = arith.addf %20, %22 : vector<64x256xf32>
    %24 = arith.negf %23 : vector<64x256xf32>
    %25 = math.exp %24 : vector<64x256xf32>
    %cst_14 = arith.constant 1.000000e+00 : f32
    %26 = vector.broadcast %cst_14 : f32 to vector<64x256xf32>
    %27 = arith.addf %26, %25 : vector<64x256xf32>
    %28 = arith.divf %26, %27 : vector<64x256xf32>
    %29 = arith.mulf %23, %28 : vector<64x256xf32>
    %c17_i32 = arith.constant 17 : i32
    %30 = tpu.dynamic_rotate %29 by %c17_i32 dim 1 : vector<64x256xf32>, i32 -> vector<64x256xf32>
    %c0_15 = arith.constant 0 : index
    %c0_16 = arith.constant 0 : index
    %c0_17 = arith.constant 0 : index
    %31 = vector.load %arg7[%c0_15, %c0_16, %c0_17] : memref<9x1x256xf32, #tpu.memory_space<vmem>>, vector<1x1x256xf32>
    %32 = vector.shape_cast %31 : vector<1x1x256xf32> to vector<1x256xf32>
    %33 = vector.broadcast %32 : vector<1x256xf32> to vector<64x256xf32>
    %34 = arith.mulf %30, %33 : vector<64x256xf32>
    %35 = arith.truncf %34 : vector<64x256xf32> to vector<64x256xbf16>
    %c16_i32 = arith.constant 16 : i32
    %36 = tpu.dynamic_rotate %29 by %c16_i32 dim 1 : vector<64x256xf32>, i32 -> vector<64x256xf32>
    %c1 = arith.constant 1 : index
    %c0_18 = arith.constant 0 : index
    %c0_19 = arith.constant 0 : index
    %37 = vector.load %arg7[%c1, %c0_18, %c0_19] : memref<9x1x256xf32, #tpu.memory_space<vmem>>, vector<1x1x256xf32>
    %38 = vector.shape_cast %37 : vector<1x1x256xf32> to vector<1x256xf32>
    %39 = vector.broadcast %38 : vector<1x256xf32> to vector<64x256xf32>
    %40 = arith.mulf %36, %39 : vector<64x256xf32>
    %41 = arith.truncf %40 : vector<64x256xf32> to vector<64x256xbf16>
    %c15_i32 = arith.constant 15 : i32
    %42 = tpu.dynamic_rotate %29 by %c15_i32 dim 1 : vector<64x256xf32>, i32 -> vector<64x256xf32>
    %c2 = arith.constant 2 : index
    %c0_20 = arith.constant 0 : index
    %c0_21 = arith.constant 0 : index
    %43 = vector.load %arg7[%c2, %c0_20, %c0_21] : memref<9x1x256xf32, #tpu.memory_space<vmem>>, vector<1x1x256xf32>
    %44 = vector.shape_cast %43 : vector<1x1x256xf32> to vector<1x256xf32>
    %45 = vector.broadcast %44 : vector<1x256xf32> to vector<64x256xf32>
    %46 = arith.mulf %42, %45 : vector<64x256xf32>
    %47 = arith.truncf %46 : vector<64x256xf32> to vector<64x256xbf16>
    %c1_i32 = arith.constant 1 : i32
    %48 = tpu.dynamic_rotate %29 by %c1_i32 dim 1 : vector<64x256xf32>, i32 -> vector<64x256xf32>
    %c3 = arith.constant 3 : index
    %c0_22 = arith.constant 0 : index
    %c0_23 = arith.constant 0 : index
    %49 = vector.load %arg7[%c3, %c0_22, %c0_23] : memref<9x1x256xf32, #tpu.memory_space<vmem>>, vector<1x1x256xf32>
    %50 = vector.shape_cast %49 : vector<1x1x256xf32> to vector<1x256xf32>
    %51 = vector.broadcast %50 : vector<1x256xf32> to vector<64x256xf32>
    %52 = arith.mulf %48, %51 : vector<64x256xf32>
    %53 = arith.truncf %52 : vector<64x256xf32> to vector<64x256xbf16>
    %54 = arith.truncf %29 : vector<64x256xf32> to vector<64x256xbf16>
    %c255_i32 = arith.constant 255 : i32
    %55 = tpu.dynamic_rotate %29 by %c255_i32 dim 1 : vector<64x256xf32>, i32 -> vector<64x256xf32>
    %c5 = arith.constant 5 : index
    %c0_24 = arith.constant 0 : index
    %c0_25 = arith.constant 0 : index
    %56 = vector.load %arg7[%c5, %c0_24, %c0_25] : memref<9x1x256xf32, #tpu.memory_space<vmem>>, vector<1x1x256xf32>
    %57 = vector.shape_cast %56 : vector<1x1x256xf32> to vector<1x256xf32>
    %58 = vector.broadcast %57 : vector<1x256xf32> to vector<64x256xf32>
    %59 = arith.mulf %55, %58 : vector<64x256xf32>
    %60 = arith.truncf %59 : vector<64x256xf32> to vector<64x256xbf16>
    %c241_i32 = arith.constant 241 : i32
    %61 = tpu.dynamic_rotate %29 by %c241_i32 dim 1 : vector<64x256xf32>, i32 -> vector<64x256xf32>
    %c6 = arith.constant 6 : index
    %c0_26 = arith.constant 0 : index
    %c0_27 = arith.constant 0 : index
    %62 = vector.load %arg7[%c6, %c0_26, %c0_27] : memref<9x1x256xf32, #tpu.memory_space<vmem>>, vector<1x1x256xf32>
    %63 = vector.shape_cast %62 : vector<1x1x256xf32> to vector<1x256xf32>
    %64 = vector.broadcast %63 : vector<1x256xf32> to vector<64x256xf32>
    %65 = arith.mulf %61, %64 : vector<64x256xf32>
    %66 = arith.truncf %65 : vector<64x256xf32> to vector<64x256xbf16>
    %c240_i32 = arith.constant 240 : i32
    %67 = tpu.dynamic_rotate %29 by %c240_i32 dim 1 : vector<64x256xf32>, i32 -> vector<64x256xf32>
    %c7 = arith.constant 7 : index
    %c0_28 = arith.constant 0 : index
    %c0_29 = arith.constant 0 : index
    %68 = vector.load %arg7[%c7, %c0_28, %c0_29] : memref<9x1x256xf32, #tpu.memory_space<vmem>>, vector<1x1x256xf32>
    %69 = vector.shape_cast %68 : vector<1x1x256xf32> to vector<1x256xf32>
    %70 = vector.broadcast %69 : vector<1x256xf32> to vector<64x256xf32>
    %71 = arith.mulf %67, %70 : vector<64x256xf32>
    %72 = arith.truncf %71 : vector<64x256xf32> to vector<64x256xbf16>
    %c239_i32 = arith.constant 239 : i32
    %73 = tpu.dynamic_rotate %29 by %c239_i32 dim 1 : vector<64x256xf32>, i32 -> vector<64x256xf32>
    %c8 = arith.constant 8 : index
    %c0_30 = arith.constant 0 : index
    %c0_31 = arith.constant 0 : index
    %74 = vector.load %arg7[%c8, %c0_30, %c0_31] : memref<9x1x256xf32, #tpu.memory_space<vmem>>, vector<1x1x256xf32>
    %75 = vector.shape_cast %74 : vector<1x1x256xf32> to vector<1x256xf32>
    %76 = vector.broadcast %75 : vector<1x256xf32> to vector<64x256xf32>
    %77 = arith.mulf %73, %76 : vector<64x256xf32>
    %78 = arith.truncf %77 : vector<64x256xf32> to vector<64x256xbf16>
    %79 = arith.truncf %1 : vector<64x256xf32> to vector<64x256xbf16>
    %80 = tpu.concatenate %35, %41, %47, %53, %54, %60, %66, %72, %78, %79 in 0 : vector<64x256xbf16>, vector<64x256xbf16>, vector<64x256xbf16>, vector<64x256xbf16>, vector<64x256xbf16>, vector<64x256xbf16>, vector<64x256xbf16>, vector<64x256xbf16>, vector<64x256xbf16>, vector<64x256xbf16> -> vector<640x256xbf16>
    %c0_32 = arith.constant 0 : index
    %c0_33 = arith.constant 0 : index
    %81 = vector.load %arg5[%c0_32, %c0_33] : memref<32x640xbf16, #tpu.memory_space<vmem>>, vector<32x640xbf16>
    %cst_34 = arith.constant dense<0.000000e+00> : vector<32x256xf32>
    %82 = tpu.matmul %81, %80, %cst_34 {dimension_numbers = #tpu.dot_dimension_numbers<[1], [0], [0], [1], [0, 0, 1, 1], [], []>} : vector<32x640xbf16>, vector<640x256xbf16>, vector<32x256xf32> -> vector<32x256xf32>
    %c0_35 = arith.constant 0 : index
    %c0_36 = arith.constant 0 : index
    %c0_37 = arith.constant 0 : index
    %83 = vector.load %arg8[%c0_35, %c0_36, %c0_37] : memref<1x1x128xf32, #tpu.memory_space<vmem>>, vector<1x1x128xf32>
    %84 = vector.shape_cast %83 : vector<1x1x128xf32> to vector<1x128xf32>
    %85 = arith.negf %84 : vector<1x128xf32>
    %86 = math.exp %85 : vector<1x128xf32>
    %cst_38 = arith.constant 1.000000e+00 : f32
    %87 = vector.broadcast %cst_38 : f32 to vector<1x128xf32>
    %88 = arith.addf %87, %86 : vector<1x128xf32>
    %89 = arith.divf %87, %88 : vector<1x128xf32>
    %90 = arith.mulf %84, %89 : vector<1x128xf32>
    %c0_39 = arith.constant 0 : index
    %c0_40 = arith.constant 0 : index
    %91 = vector.load %arg9[%c0_39, %c0_40] : memref<32x128xf32, #tpu.memory_space<vmem>>, vector<32x128xf32>
    %92 = vector.broadcast %90 : vector<1x128xf32> to vector<32x128xf32>
    %93 = arith.mulf %91, %92 : vector<32x128xf32>
    %cst_41 = arith.constant dense<0.000000e+00> : vector<32xf32>
    %94 = vector.multi_reduction <add>, %93, %cst_41 [1] : vector<32x128xf32> to vector<32xf32>
    %95 = vector.shape_cast %94 : vector<32xf32> to vector<32x1xf32>
    %96 = vector.broadcast %95 : vector<32x1xf32> to vector<32x256xf32>
    %97 = arith.addf %82, %96 : vector<32x256xf32>
    %c0_42 = arith.constant 0 : index
    %c0_43 = arith.constant 0 : index
    %98 = vector.load %arg6[%c0_42, %c0_43] : memref<32x1xf32, #tpu.memory_space<vmem>>, vector<32x1xf32>
    %99 = vector.broadcast %98 : vector<32x1xf32> to vector<32x256xf32>
    %100 = arith.addf %97, %99 : vector<32x256xf32>
    %c0_44 = arith.constant 0 : index
    %c0_45 = arith.constant 0 : index
    %c0_46 = arith.constant 0 : index
    %101 = vector.load %arg10[%c0_44, %c0_45, %c0_46] : memref<1x32x256xf32, #tpu.memory_space<vmem>>, vector<1x32x256xf32>
    %102 = vector.shape_cast %101 : vector<1x32x256xf32> to vector<32x256xf32>
    %103 = vector.shape_cast %100 : vector<32x256xf32> to vector<1x32x256xf32>
    tpu.vector_store %arg10[%c0_44, %c0_45, %c0_46], %103 {strides = array<i32>} : memref<1x32x256xf32, #tpu.memory_space<vmem>>, vector<1x32x256xf32>,
    return
  }
  func.func @transform_0(%arg0: i32) -> (i32, i32, i32) {
    %c0_i32 = arith.constant 0 : i32
    %c0_i32_0 = arith.constant 0 : i32
    %c0_i32_1 = arith.constant 0 : i32
    return %arg0, %c0_i32, %c0_i32_0 : i32, i32, i32
  }
  func.func @transform_1(%arg0: i32) -> (i32, i32) {
    %c0_i32 = arith.constant 0 : i32
    %c0_i32_0 = arith.constant 0 : i32
    %c0_i32_1 = arith.constant 0 : i32
    return %c0_i32, %c0_i32_0 : i32, i32
  }
  func.func @transform_2(%arg0: i32) -> (i32, i32) {
    %c0_i32 = arith.constant 0 : i32
    %c0_i32_0 = arith.constant 0 : i32
    %c0_i32_1 = arith.constant 0 : i32
    return %c0_i32, %c0_i32_0 : i32, i32
  }
  func.func @transform_3(%arg0: i32) -> (i32, i32) {
    %c0_i32 = arith.constant 0 : i32
    %c0_i32_0 = arith.constant 0 : i32
    %c0_i32_1 = arith.constant 0 : i32
    return %c0_i32, %c0_i32_0 : i32, i32
  }
  func.func @transform_4(%arg0: i32) -> (i32, i32) {
    %c0_i32 = arith.constant 0 : i32
    %c0_i32_0 = arith.constant 0 : i32
    %c0_i32_1 = arith.constant 0 : i32
    return %c0_i32, %c0_i32_0 : i32, i32
  }
  func.func @transform_5(%arg0: i32) -> (i32, i32) {
    %c0_i32 = arith.constant 0 : i32
    %c0_i32_0 = arith.constant 0 : i32
    %c0_i32_1 = arith.constant 0 : i32
    return %c0_i32, %c0_i32_0 : i32, i32
  }
  func.func @transform_6(%arg0: i32) -> (i32, i32, i32) {
    %c0_i32 = arith.constant 0 : i32
    %c0_i32_0 = arith.constant 0 : i32
    %c0_i32_1 = arith.constant 0 : i32
    %c0_i32_2 = arith.constant 0 : i32
    return %c0_i32, %c0_i32_0, %c0_i32_1 : i32, i32, i32
  }
  func.func @transform_7(%arg0: i32) -> (i32, i32, i32) {
    %c0_i32 = arith.constant 0 : i32
    %c0_i32_0 = arith.constant 0 : i32
    %c0_i32_1 = arith.constant 0 : i32
    return %arg0, %c0_i32, %c0_i32_0 : i32, i32, i32
  }
  func.func @transform_8(%arg0: i32) -> (i32, i32) {
    %c0_i32 = arith.constant 0 : i32
    %c0_i32_0 = arith.constant 0 : i32
    %c0_i32_1 = arith.constant 0 : i32
    return %c0_i32, %c0_i32_0 : i32, i32
  }
  func.func @transform_9(%arg0: i32) -> (i32, i32, i32) {
    %c0_i32 = arith.constant 0 : i32
    %c0_i32_0 = arith.constant 0 : i32
    %c0_i32_1 = arith.constant 0 : i32
    return %arg0, %c0_i32, %c0_i32_0 : i32, i32, i32
  }
}

</mosaic_0001>

<llo_original>
// kernel: tpu_custom_call.1
$region0: #{tpu_custom_call.1}
  #allocation0 [shape = 'u32[]', space=smem, size = 0x4, offset = 0x4, fixed_abs, tag = 'smem constant byte address 0x4 - core index']
  #allocation1 [shape = 'u32[72,128]{1,0:T(1,128)}', space=vmem, size = 0x9000, scoped, tag = 'internal scratch']
  %s0 = inlined_call_operand.hbm [shape: f32[2,64,256], index: 0, kind: input, shape index: {}]
  %s1 = inlined_call_operand.vmem [shape: f32[64,64], index: 1, kind: input, shape index: {}]
  %s2 = inlined_call_operand.vmem [shape: f32[64,1], index: 2, kind: input, shape index: {}]
  %s3 = inlined_call_operand.vmem [shape: f32[64,1], index: 3, kind: input, shape index: {}]
  %s4 = inlined_call_operand.vmem [shape: bf16[32,640], index: 4, kind: input, shape index: {}]
  %s5 = inlined_call_operand.vmem [shape: f32[32,1], index: 5, kind: input, shape index: {}]
  %s6 = inlined_call_operand.hbm [shape: f32[9,1,256], index: 6, kind: input, shape index: {}]
  %s7 = inlined_call_operand.vmem [shape: f32[2,1,128], index: 7, kind: input, shape index: {}]
  %s8 = inlined_call_operand.hbm [shape: f32[32,128], index: 8, kind: input, shape index: {}]
  %s9 = inlined_call_operand.hbm [shape: f32[2,32,256], index: 9, kind: output, shape index: {}]
  %s10 = sld [smem:[#allocation0]]
  $region81: #{tpu_custom_call.1} parent=0
    _
  %s12 = ssub.s32 1, %s10
  %s13 = scalar_select 0, %s12, %s10
  $region1: #{tpu_custom_call.1} parent=0
    #allocation2 [shape = 'u8[131072]{0}', space=vmem, size = 0x20000, scoped, tag = 'input window, operand 0']
    #allocation3 [shape = 's32[2]{0}', space=sflag, size = 0x8, scoped, tag = 'scoped memory for tpu_custom_call.1']
    #allocation4 [shape = 's32[2]{0}', space=sflag, size = 0x8, scoped, tag = 'scoped memory for tpu_custom_call.1']
    #allocation5 [shape = 'u8[9216]{0}', space=vmem, size = 0x2400, scoped, tag = 'input window, operand 6, single buffered']
    #allocation6 [shape = 's32[1]{0}', space=sflag, size = 0x4, scoped, tag = 'scoped memory for tpu_custom_call.1']
    #allocation7 [shape = 'u8[16384]{0}', space=vmem, size = 0x4000, scoped, tag = 'input window, operand 8, single buffered']
    #allocation8 [shape = 'u8[65536]{0}', space=vmem, size = 0x10000, scoped, tag = 'output window, operand 0']
    %14 = vsyncpa [#allocation3], 0
    %s15 = scalar_lea.sflag [#allocation3], 1
    %16 = vsyncpa %s15, 0
    %17 = vsyncpa [#allocation6], 0
    %18 = vsyncpa [#allocation4], 0
    %s19 = scalar_lea.sflag [#allocation4], 1
    %20 = vsyncpa %s19, 0
    loop: start=0, step=1, limit=4
    $region2: #{tpu_custom_call.1} parent=1 // loop_pre_header
      _
    $region3: #{tpu_custom_call.1} parent=1 // loop_header
      %s22 = sphi 0, %s26
      %p23 = scmp.ge.s32.totalorder %s22, 4
      %s32 = sphi 0, %s34
      %s35 = sphi 0, %s32
      %s36 = sphi 0, %s35
      %s52 = sphi 0, %s36
      %s56 = sphi 0, %s56
      %s58 = sphi 0, %s56
      %s59 = sphi 0, %s58
      %s73 = sphi 0, %s59
      %s77 = sphi 0, %s77
      %s79 = sphi 0, %s77
      %s80 = sphi 0, %s79
      %s94 = sphi 0, %s80
      %s98 = sphi 0, %s98
      %s100 = sphi 0, %s98
      %s101 = sphi 0, %s100
      %s115 = sphi 0, %s101
      %s119 = sphi 0, %s119
      %s121 = sphi 0, %s119
      %s122 = sphi 0, %s121
      %s136 = sphi 0, %s122
      %s140 = sphi 0, %s140
      %s142 = sphi 0, %s140
      %s143 = sphi 0, %s142
      %s157 = sphi 0, %s143
      %s161 = sphi 0, %s161
      %s163 = sphi 0, %s161
      %s164 = sphi 0, %s163
      %s178 = sphi 0, %s164
      %s184 = sphi 0, %s186
      %s187 = sphi 0, %s184
      %s188 = sphi 0, %s187
      %s204 = sphi 0, %s188
      %s208 = sphi 0, %s208
      %s210 = sphi 0, %s208
      %s211 = sphi 0, %s210
      %s225 = sphi 0, %s211
      %s231 = sphi 0, %s233
      %s234 = sphi 0, %s231
      %s235 = sphi 0, %s234
      %s251 = sphi 0, %s235
    $region4: #{tpu_custom_call.1} parent=1 // loop_header_branch
      %25 = sbr.rel (%p23) target = $region8
    $region5: #{tpu_custom_call.1} parent=1 // loop_body
      %s27 = ssub.s32 %s22, 1
      %s28 = ssub.s32 %s22, 2
      %s29 = sadd.s32 %s22, 1
      %s30 = ssub.s32 %s22, %s29
      %p31 = scmp.eq.s32.totalorder %s30, 0
      %s33 = sadd.s32 %s32, 1
      %s34 = scalar_select %p31, %s32, %s33
      %p37 = pneg %p31
      %p38 = scmp.eq.s32.totalorder %s22, 1
      %p39 = por %p37, %p38
      %p40 = scmp.ne.s32.totalorder %s32, %s35
      %p41 = scmp.eq.s32.totalorder %s22, 0
      %p42 = por %p40, %p41
      %p43 = scmp.ne.s32.totalorder %s32, %s35
      %p44 = scmp.eq.s32.totalorder %s27, 1
      %p45 = por %p43, %p44
      %p46 = scmp.ne.s32.totalorder %s35, %s36
      %p47 = scmp.eq.s32.totalorder %s27, 0
      %p48 = por %p46, %p47
      %p49 = scmp.ne.s32.totalorder %s35, %s36
      %p50 = scmp.eq.s32.totalorder %s28, 1
      %p51 = por %p49, %p50
      %p53 = scmp.ne.s32.totalorder %s36, %s52
      %p54 = scmp.eq.s32.totalorder %s28, 0
      %p55 = por %p53, %p54
      %s57 = sadd.s32 %s56, 1
      %p60 = scmp.eq.s32.totalorder %s22, 1
      %p61 = scmp.ne.s32.totalorder %s56, %s58
      %p62 = scmp.eq.s32.totalorder %s22, 0
      %p63 = por %p61, %p62
      %p64 = scmp.ne.s32.totalorder %s56, %s58
      %p65 = scmp.eq.s32.totalorder %s27, 1
      %p66 = por %p64, %p65
      %p67 = scmp.ne.s32.totalorder %s58, %s59
      %p68 = scmp.eq.s32.totalorder %s27, 0
      %p69 = por %p67, %p68
      %p70 = scmp.ne.s32.totalorder %s58, %s59
      %p71 = scmp.eq.s32.totalorder %s28, 1
      %p72 = por %p70, %p71
      %p74 = scmp.ne.s32.totalorder %s59, %s73
      %p75 = scmp.eq.s32.totalorder %s28, 0
      %p76 = por %p74, %p75
      %s78 = sadd.s32 %s77, 1
      %p81 = scmp.eq.s32.totalorder %s22, 1
      %p82 = scmp.ne.s32.totalorder %s77, %s79
      %p83 = scmp.eq.s32.totalorder %s22, 0
      %p84 = por %p82, %p83
      %p85 = scmp.ne.s32.totalorder %s77, %s79
      %p86 = scmp.eq.s32.totalorder %s27, 1
      %p87 = por %p85, %p86
      %p88 = scmp.ne.s32.totalorder %s79, %s80
      %p89 = scmp.eq.s32.totalorder %s27, 0
      %p90 = por %p88, %p89
      %p91 = scmp.ne.s32.totalorder %s79, %s80
      %p92 = scmp.eq.s32.totalorder %s28, 1
      %p93 = por %p91, %p92
      %p95 = scmp.ne.s32.totalorder %s80, %s94
      %p96 = scmp.eq.s32.totalorder %s28, 0
      %p97 = por %p95, %p96
      %s99 = sadd.s32 %s98, 1
      %p102 = scmp.eq.s32.totalorder %s22, 1
      %p103 = scmp.ne.s32.totalorder %s98, %s100
      %p104 = scmp.eq.s32.totalorder %s22, 0
      %p105 = por %p103, %p104
      %p106 = scmp.ne.s32.totalorder %s98, %s100
      %p107 = scmp.eq.s32.totalorder %s27, 1
      %p108 = por %p106, %p107
      %p109 = scmp.ne.s32.totalorder %s100, %s101
      %p110 = scmp.eq.s32.totalorder %s27, 0
      %p111 = por %p109, %p110
      %p112 = scmp.ne.s32.totalorder %s100, %s101
      %p113 = scmp.eq.s32.totalorder %s28, 1
      %p114 = por %p112, %p113
      %p116 = scmp.ne.s32.totalorder %s101, %s115
      %p117 = scmp.eq.s32.totalorder %s28, 0
      %p118 = por %p116, %p117
      %s120 = sadd.s32 %s119, 1
      %p123 = scmp.eq.s32.totalorder %s22, 1
      %p124 = scmp.ne.s32.totalorder %s119, %s121
      %p125 = scmp.eq.s32.totalorder %s22, 0
      %p126 = por %p124, %p125
      %p127 = scmp.ne.s32.totalorder %s119, %s121
      %p128 = scmp.eq.s32.totalorder %s27, 1
      %p129 = por %p127, %p128
      %p130 = scmp.ne.s32.totalorder %s121, %s122
      %p131 = scmp.eq.s32.totalorder %s27, 0
      %p132 = por %p130, %p131
      %p133 = scmp.ne.s32.totalorder %s121, %s122
      %p134 = scmp.eq.s32.totalorder %s28, 1
      %p135 = por %p133, %p134
      %p137 = scmp.ne.s32.totalorder %s122, %s136
      %p138 = scmp.eq.s32.totalorder %s28, 0
      %p139 = por %p137, %p138
      %s141 = sadd.s32 %s140, 1
      %p144 = scmp.eq.s32.totalorder %s22, 1
      %p145 = scmp.ne.s32.totalorder %s140, %s142
      %p146 = scmp.eq.s32.totalorder %s22, 0
      %p147 = por %p145, %p146
      %p148 = scmp.ne.s32.totalorder %s140, %s142
      %p149 = scmp.eq.s32.totalorder %s27, 1
      %p150 = por %p148, %p149
      %p151 = scmp.ne.s32.totalorder %s142, %s143
      %p152 = scmp.eq.s32.totalorder %s27, 0
      %p153 = por %p151, %p152
      %p154 = scmp.ne.s32.totalorder %s142, %s143
      %p155 = scmp.eq.s32.totalorder %s28, 1
      %p156 = por %p154, %p155
      %p158 = scmp.ne.s32.totalorder %s143, %s157
      %p159 = scmp.eq.s32.totalorder %s28, 0
      %p160 = por %p158, %p159
      %s162 = sadd.s32 %s161, 1
      %p165 = scmp.eq.s32.totalorder %s22, 1
      %p166 = scmp.ne.s32.totalorder %s161, %s163
      %p167 = scmp.eq.s32.totalorder %s22, 0
      %p168 = por %p166, %p167
      %p169 = scmp.ne.s32.totalorder %s161, %s163
      %p170 = scmp.eq.s32.totalorder %s27, 1
      %p171 = por %p169, %p170
      %p172 = scmp.ne.s32.totalorder %s163, %s164
      %p173 = scmp.eq.s32.totalorder %s27, 0
      %p174 = por %p172, %p173
      %p175 = scmp.ne.s32.totalorder %s163, %s164
      %p176 = scmp.eq.s32.totalorder %s28, 1
      %p177 = por %p175, %p176
      %p179 = scmp.ne.s32.totalorder %s164, %s178
      %p180 = scmp.eq.s32.totalorder %s28, 0
      %p181 = por %p179, %p180
      %s182 = ssub.s32 %s22, %s29
      %p183 = scmp.eq.s32.totalorder %s182, 0
      %s185 = sadd.s32 %s184, 1
      %s186 = scalar_select %p183, %s184, %s185
      %p189 = pneg %p183
      %p190 = scmp.eq.s32.totalorder %s22, 1
      %p191 = por %p189, %p190
      %p192 = scmp.ne.s32.totalorder %s184, %s187
      %p193 = scmp.eq.s32.totalorder %s22, 0
      %p194 = por %p192, %p193
      %p195 = scmp.ne.s32.totalorder %s184, %s187
      %p196 = scmp.eq.s32.totalorder %s27, 1
      %p197 = por %p195, %p196
      %p198 = scmp.ne.s32.totalorder %s187, %s188
      %p199 = scmp.eq.s32.totalorder %s27, 0
      %p200 = por %p198, %p199
      %p201 = scmp.ne.s32.totalorder %s187, %s188
      %p202 = scmp.eq.s32.totalorder %s28, 1
      %p203 = por %p201, %p202
      %p205 = scmp.ne.s32.totalorder %s188, %s204
      %p206 = scmp.eq.s32.totalorder %s28, 0
      %p207 = por %p205, %p206
      %s209 = sadd.s32 %s208, 1
      %p212 = scmp.eq.s32.totalorder %s22, 1
      %p213 = scmp.ne.s32.totalorder %s208, %s210
      %p214 = scmp.eq.s32.totalorder %s22, 0
      %p215 = por %p213, %p214
      %p216 = scmp.ne.s32.totalorder %s208, %s210
      %p217 = scmp.eq.s32.totalorder %s27, 1
      %p218 = por %p216, %p217
      %p219 = scmp.ne.s32.totalorder %s210, %s211
      %p220 = scmp.eq.s32.totalorder %s27, 0
      %p221 = por %p219, %p220
      %p222 = scmp.ne.s32.totalorder %s210, %s211
      %p223 = scmp.eq.s32.totalorder %s28, 1
      %p224 = por %p222, %p223
      %p226 = scmp.ne.s32.totalorder %s211, %s225
      %p227 = scmp.eq.s32.totalorder %s28, 0
      %p228 = por %p226, %p227
      %s229 = ssub.s32 %s22, %s29
      %p230 = scmp.eq.s32.totalorder %s229, 0
      %s232 = sadd.s32 %s231, 1
      %s233 = scalar_select %p230, %s231, %s232
      %p236 = pneg %p230
      %p237 = scmp.eq.s32.totalorder %s22, 1
      %p238 = por %p236, %p237
      %p239 = scmp.ne.s32.totalorder %s231, %s234
      %p240 = scmp.eq.s32.totalorder %s22, 0
      %p241 = por %p239, %p240
      %p242 = scmp.ne.s32.totalorder %s231, %s234
      %p243 = scmp.eq.s32.totalorder %s27, 1
      %p244 = por %p242, %p243
      %p245 = scmp.ne.s32.totalorder %s234, %s235
      %p246 = scmp.eq.s32.totalorder %s27, 0
      %p247 = por %p245, %p246
      %p248 = scmp.ne.s32.totalorder %s234, %s235
      %p249 = scmp.eq.s32.totalorder %s28, 1
      %p250 = por %p248, %p249
      %p252 = scmp.ne.s32.totalorder %s235, %s251
      %p253 = scmp.eq.s32.totalorder %s28, 0
      %p254 = por %p252, %p253
      %p255 = scmp.le.s32.totalorder 1, %s22
      %p256 = scmp.lt.s32.totalorder %s22, 3
      %p257 = pnand %p255, %p256
      %p258 = pneg %p257
      // Predicated region
      $region9: #{tpu_custom_call.1} parent=5 // pred_check
        _
      $region10: #{tpu_custom_call.1} parent=5 // pred_check_branch
        %260 = sbr.rel (%p257) target = $region12
      $region11: #{tpu_custom_call.1} parent=5 // pred_region
        %s261 = ssub.s32 %s22, 1
        // Predicated region
        $region13: #{tpu_custom_call.1} parent=11 // pred_check
          %p262 = pneg %p69
        $region14: #{tpu_custom_call.1} parent=11 // pred_check_branch
          %264 = sbr.rel (%p262) target = $region16
        $region15: #{tpu_custom_call.1} parent=11 // pred_region
          _
        $region16: #{tpu_custom_call.1} parent=11 // pred_fallthru
          _
        // Predicated region
        $region17: #{tpu_custom_call.1} parent=11 // pred_check
          %p265 = pneg %p90
        $region18: #{tpu_custom_call.1} parent=11 // pred_check_branch
          %267 = sbr.rel (%p265) target = $region20
        $region19: #{tpu_custom_call.1} parent=11 // pred_region
          _
        $region20: #{tpu_custom_call.1} parent=11 // pred_fallthru
          _
        // Predicated region
        $region21: #{tpu_custom_call.1} parent=11 // pred_check
          %p268 = pneg %p111
        $region22: #{tpu_custom_call.1} parent=11 // pred_check_branch
          %270 = sbr.rel (%p268) target = $region24
        $region23: #{tpu_custom_call.1} parent=11 // pred_region
          _
        $region24: #{tpu_custom_call.1} parent=11 // pred_fallthru
          _
        // Predicated region
        $region25: #{tpu_custom_call.1} parent=11 // pred_check
          %p271 = pneg %p132
        $region26: #{tpu_custom_call.1} parent=11 // pred_check_branch
          %273 = sbr.rel (%p271) target = $region28
        $region27: #{tpu_custom_call.1} parent=11 // pred_region
          _
        $region28: #{tpu_custom_call.1} parent=11 // pred_fallthru
          _
        // Predicated region
        $region29: #{tpu_custom_call.1} parent=11 // pred_check
          %p274 = pneg %p153
        $region30: #{tpu_custom_call.1} parent=11 // pred_check_branch
          %276 = sbr.rel (%p274) target = $region32
        $region31: #{tpu_custom_call.1} parent=11 // pred_region
          _
        $region32: #{tpu_custom_call.1} parent=11 // pred_fallthru
          _
        // Predicated region
        $region33: #{tpu_custom_call.1} parent=11 // pred_check
          %p277 = pneg %p174
        $region34: #{tpu_custom_call.1} parent=11 // pred_check_branch
          %279 = sbr.rel (%p277) target = $region36
        $region35: #{tpu_custom_call.1} parent=11 // pred_region
          %281 = vsyncadd [#allocation6], 0
          %s282 = sshll.u32 %s6, 4
          %s283 = int_to_ptr.hbm [resolvable:$true] %s282
          %s284 = sshll.u32 [#allocation5], 4
          %s285 = int_to_ptr.vmem [resolvable:$true] %s284
          %290 = dma.hbm_to_vmem [thread:$0]  %s283, 288, %s285, [#allocation6], 32, 32, 2
        $region36: #{tpu_custom_call.1} parent=11 // pred_fallthru
          _
        // Predicated region
        $region37: #{tpu_custom_call.1} parent=11 // pred_check
          %p291 = pneg %p221
        $region38: #{tpu_custom_call.1} parent=11 // pred_check_branch
          %293 = sbr.rel (%p291) target = $region40
        $region39: #{tpu_custom_call.1} parent=11 // pred_region
          %295 = vsyncadd [#allocation6], 0
          %s296 = sshll.u32 %s8, 4
          %s297 = int_to_ptr.hbm [resolvable:$true] %s296
          %s298 = sshll.u32 [#allocation7], 4
          %s299 = int_to_ptr.vmem [resolvable:$true] %s298
          %304 = dma.hbm_to_vmem [thread:$0]  %s297, 512, %s299, [#allocation6], 128, 128, 8
        $region40: #{tpu_custom_call.1} parent=11 // pred_fallthru
          _
      $region12: #{tpu_custom_call.1} parent=5 // pred_fallthru
        _
      %p305 = scmp.lt.s32.totalorder %s22, 2
      // Predicated region
      $region41: #{tpu_custom_call.1} parent=5 // pred_check
        %p306 = pneg %p305
      $region42: #{tpu_custom_call.1} parent=5 // pred_check_branch
        %308 = sbr.rel (%p306) target = $region44
      $region43: #{tpu_custom_call.1} parent=5 // pred_region
        // Predicated region
        $region45: #{tpu_custom_call.1} parent=43 // pred_check
          %p309 = pneg %p42
        $region46: #{tpu_custom_call.1} parent=43 // pred_check_branch
          %311 = sbr.rel (%p309) target = $region48
        $region47: #{tpu_custom_call.1} parent=43 // pred_region
          %s312 = sand.u32 %s32, 1
          %s313 = scalar_lea.sflag [#allocation3], %s312
          %s314 = sand.u32 %s32, 1
          %s315 = smul.addr %s314, 128
          %s316 = scalar_lea.vmem [#allocation2], %s315
          %318 = vsyncadd %s313, 0
          %s319 = smul.addr %s22, 16
          %s320 = smul.addr %s319, 8
          %s321 = scalar_lea.hbm %s0, %s320
          %s322 = sshll.u32 %s321, 4
          %s323 = int_to_ptr.hbm [resolvable:$true] %s322
          %s324 = sshll.u32 %s316, 4
          %s325 = int_to_ptr.vmem [resolvable:$true] %s324
          %330 = dma.hbm_to_vmem [thread:$0]  %s323, 2048, %s325, %s313, 256, 256, 16
        $region48: #{tpu_custom_call.1} parent=43 // pred_fallthru
          _
        // Predicated region
        $region49: #{tpu_custom_call.1} parent=43 // pred_check
          %p331 = pneg %p194
        $region50: #{tpu_custom_call.1} parent=43 // pred_check_branch
          %333 = sbr.rel (%p331) target = $region52
        $region51: #{tpu_custom_call.1} parent=43 // pred_region
          %p334 = scmp.lt.s32.totalorder %s22, 1
          %s335 = scalar_select %p334, %s22, 1
          %s336 = scalar_lea.vmem %s7, %s335
        $region52: #{tpu_custom_call.1} parent=43 // pred_fallthru
          _
      $region44: #{tpu_custom_call.1} parent=5 // pred_fallthru
        _
      %p337 = scmp.le.s32.totalorder 1, %s22
      %p338 = scmp.lt.s32.totalorder %s22, 3
      %p339 = pnand %p337, %p338
      %p340 = pneg %p339
      // Predicated region
      $region53: #{tpu_custom_call.1} parent=5 // pred_check
        _
      $region54: #{tpu_custom_call.1} parent=5 // pred_check_branch
        %342 = sbr.rel (%p339) target = $region56
      $region55: #{tpu_custom_call.1} parent=5 // pred_region
        %s343 = ssub.s32 %s22, 1
        %s344 = sand.u32 %s35, 1
        %s345 = scalar_lea.sflag [#allocation3], %s344
        %s346 = sand.u32 %s35, 1
        %s347 = smul.addr %s346, 128
        %s348 = scalar_lea.vmem [#allocation2], %s347
        // Predicated region
        $region57: #{tpu_custom_call.1} parent=55 // pred_check
          %p349 = pneg %p48
        $region58: #{tpu_custom_call.1} parent=55 // pred_check_branch
          %351 = sbr.rel (%p349) target = $region60
        $region59: #{tpu_custom_call.1} parent=55 // pred_region
          %353 = dma.done %s345, 2048
        $region60: #{tpu_custom_call.1} parent=55 // pred_fallthru
          _
        // Predicated region
        $region61: #{tpu_custom_call.1} parent=55 // pred_check
          %p354 = pneg %p174
        $region62: #{tpu_custom_call.1} parent=55 // pred_check_branch
          %356 = sbr.rel (%p354) target = $region64
        $region63: #{tpu_custom_call.1} parent=55 // pred_region
          %358 = dma.done [#allocation6], 288
        $region64: #{tpu_custom_call.1} parent=55 // pred_fallthru
          _
        // Predicated region
        $region65: #{tpu_custom_call.1} parent=55 // pred_check
          %p359 = pneg %p221
        $region66: #{tpu_custom_call.1} parent=55 // pred_check_branch
          %361 = sbr.rel (%p359) target = $region68
        $region67: #{tpu_custom_call.1} parent=55 // pred_region
          %363 = dma.done [#allocation6], 512
        $region68: #{tpu_custom_call.1} parent=55 // pred_fallthru
          _
        %s364 = sand.u32 %s35, 1
        %s365 = scalar_lea.sflag [#allocation3], %s364
        %s366 = sand.u32 %s35, 1
        %s367 = smul.addr %s366, 128
        %s368 = scalar_lea.vmem [#allocation2], %s367
        %p369 = pneg %p48
        %p370 = pneg %p45
        %p371 = pneg %p69
        %p372 = pneg %p66
        %p373 = pneg %p90
        %p374 = pneg %p87
        %p375 = pneg %p111
        %p376 = pneg %p108
        %p377 = pneg %p132
        %p378 = pneg %p129
        %p379 = pneg %p153
        %p380 = pneg %p150
        %p381 = pneg %p174
        %p382 = pneg %p171
        %p383 = scmp.lt.s32.totalorder %s27, 1
        %s384 = scalar_select %p383, %s27, 1
        %s385 = scalar_lea.vmem %s7, %s384
        %p386 = pneg %p200
        %p387 = pneg %p197
        %p388 = pneg %p221
        %p389 = pneg %p218
        %p390 = pneg %p247
        %p391 = pneg %p244
        %s392 = sand.u32 %s234, 1
        %s393 = scalar_lea.sflag [#allocation4], %s392
        %s394 = sand.u32 %s234, 1
        %s395 = smul.addr %s394, 64
        %s396 = scalar_lea.vmem [#allocation8], %s395
        %p397 = scmp.lt.s32.totalorder %s27, 1
        %s398 = scalar_select %p397, %s27, 1
        %s399 = scalar_lea.vmem %s7, %s398
        %v400 = vld [vmem:[%s348] sm:$0xff]
        %v401 = vld [vmem:[%s348 + $0x8] sm:$0xff]
        %v402 = vld [vmem:[%s348 + $0x10] sm:$0xff]
        %v403 = vld [vmem:[%s348 + $0x18] sm:$0xff]
        %v404 = vld [vmem:[%s348 + $0x20] sm:$0xff]
        %v405 = vld [vmem:[%s348 + $0x28] sm:$0xff]
        %v406 = vld [vmem:[%s348 + $0x30] sm:$0xff]
        %v407 = vld [vmem:[%s348 + $0x38] sm:$0xff]
        %v408 = vld [vmem:[%s348 + $0x40] sm:$0xff]
        %v409 = vld [vmem:[%s348 + $0x48] sm:$0xff]
        %v410 = vld [vmem:[%s348 + $0x50] sm:$0xff]
        %v411 = vld [vmem:[%s348 + $0x58] sm:$0xff]
        %v412 = vld [vmem:[%s348 + $0x60] sm:$0xff]
        %v413 = vld [vmem:[%s348 + $0x68] sm:$0xff]
        %v414 = vld [vmem:[%s348 + $0x70] sm:$0xff]
        %v415 = vld [vmem:[%s348 + $0x78] sm:$0xff]
        %v416 = vadd.f32 %v400, %v401
        %417 = vadd.xlane.f32.xlu0 %v416
        %v418 = vpop.xlane.xlu0 %417
        %v419 = vadd.f32 %v402, %v403
        %420 = vadd.xlane.f32.xlu0 %v419
        %v421 = vpop.xlane.xlu0 %420
        %v422 = vadd.f32 %v404, %v405
        %423 = vadd.xlane.f32.xlu0 %v422
        %v424 = vpop.xlane.xlu0 %423
        %v425 = vadd.f32 %v406, %v407
        %426 = vadd.xlane.f32.xlu0 %v425
        %v427 = vpop.xlane.xlu0 %426
        %v428 = vadd.f32 %v408, %v409
        %429 = vadd.xlane.f32.xlu0 %v428
        %v430 = vpop.xlane.xlu0 %429
        %v431 = vadd.f32 %v410, %v411
        %432 = vadd.xlane.f32.xlu0 %v431
        %v433 = vpop.xlane.xlu0 %432
        %v434 = vadd.f32 %v412, %v413
        %435 = vadd.xlane.f32.xlu0 %v434
        %v436 = vpop.xlane.xlu0 %435
        %v437 = vadd.f32 %v414, %v415
        %438 = vadd.xlane.f32.xlu0 %v437
        %v439 = vpop.xlane.xlu0 %438
        %v440 = vld [vmem:[%s1] sm:$0xff]
        %v441 = vld [vmem:[%s1 + $0x8] sm:$0xff]
        %v442 = vld [vmem:[%s1 + $0x10] sm:$0xff]
        %v443 = vld [vmem:[%s1 + $0x18] sm:$0xff]
        %v444 = vld [vmem:[%s1 + $0x20] sm:$0xff]
        %v445 = vld [vmem:[%s1 + $0x28] sm:$0xff]
        %v446 = vld [vmem:[%s1 + $0x30] sm:$0xff]
        %v447 = vld [vmem:[%s1 + $0x38] sm:$0xff]
        %vm448 = vcmask 523264
        %v450 = vsel %vm448, %v440, 0
        %v453 = vsel %vm448, %v441, 0
        %v456 = vsel %vm448, %v442, 0
        %v459 = vsel %vm448, %v443, 0
        %v462 = vsel %vm448, %v444, 0
        %v465 = vsel %vm448, %v445, 0
        %v468 = vsel %vm448, %v446, 0
        %v471 = vsel %vm448, %v447, 0
        %473 = vmatpush.msra.mxu0 0.0
        %474 = vmatpush.msra.mxu0 0.0
        %475 = vmatpush.msra.mxu0 0.0
        %476 = vmatpush.msra.mxu0 0.0
        %477 = vmatpush.msra.mxu0 0.0
        %478 = vmatpush.msra.mxu0 0.0
        %479 = vmatpush.msra.mxu0 0.0
        %480 = vmatpush.msra.mxu0 0.0
        %481 = vmatpush.msra.mxu0 %v439
        %482 = vmatpush.msra.mxu0 %v436
        %483 = vmatpush.msra.mxu0 %v433
        %484 = vmatpush.msra.mxu0 %v430
        %485 = vmatpush.msra.mxu0 %v427
        %486 = vmatpush.msra.mxu0 %v424
        %487 = vmatpush.msra.mxu0 %v421
        %488 = vmatpush.msra.mxu0 %v418
        %489 = vmatmul.f32.gmra.mxu0 %v450
        %v490 = vpop.f32.mrf.mxu0
        %v491 = vadd.f32 0.0, %v490
        %492 = vmatmul.f32.gmra.mxu0 %v453
        %v493 = vpop.f32.mrf.mxu0
        %v494 = vadd.f32 0.0, %v493
        %495 = vmatmul.f32.gmra.mxu0 %v456
        %v496 = vpop.f32.mrf.mxu0
        %v497 = vadd.f32 0.0, %v496
        %498 = vmatmul.f32.gmra.mxu0 %v459
        %v499 = vpop.f32.mrf.mxu0
        %v500 = vadd.f32 0.0, %v499
        %501 = vmatmul.f32.gmra.mxu0 %v462
        %v502 = vpop.f32.mrf.mxu0
        %v503 = vadd.f32 0.0, %v502
        %504 = vmatmul.f32.gmra.mxu0 %v465
        %v505 = vpop.f32.mrf.mxu0
        %v506 = vadd.f32 0.0, %v505
        %507 = vmatmul.f32.gmra.mxu0 %v468
        %v508 = vpop.f32.mrf.mxu0
        %v509 = vadd.f32 0.0, %v508
        %510 = vmatmul.f32.gmra.mxu0 %v471
        %v511 = vpop.f32.mrf.mxu0
        %v512 = vadd.f32 0.0, %v511
        %513 = vdwg.mxu0
        %515 = vset.pattern.permute.xlu0 0
        %516 = vperm.xlu0 %515, %v491
        %v517 = vpop.permute.xlu0 %516
        %520 = vset.pattern.permute.xlu0 0
        %521 = vperm.xlu0 %520, %v494
        %v522 = vpop.permute.xlu0 %521
        %525 = vset.pattern.permute.xlu0 0
        %526 = vperm.xlu0 %525, %v497
        %v527 = vpop.permute.xlu0 %526
        %530 = vset.pattern.permute.xlu0 0
        %531 = vperm.xlu0 %530, %v500
        %v532 = vpop.permute.xlu0 %531
        %535 = vset.pattern.permute.xlu0 0
        %536 = vperm.xlu0 %535, %v503
        %v537 = vpop.permute.xlu0 %536
        %540 = vset.pattern.permute.xlu0 0
        %541 = vperm.xlu0 %540, %v506
        %v542 = vpop.permute.xlu0 %541
        %545 = vset.pattern.permute.xlu0 0
        %546 = vperm.xlu0 %545, %v509
        %v547 = vpop.permute.xlu0 %546
        %550 = vset.pattern.permute.xlu0 0
        %551 = vperm.xlu0 %550, %v512
        %v552 = vpop.permute.xlu0 %551
        %v554 = vsub.f32 %v400, %v517
        %v555 = vsub.f32 %v401, %v517
        %v556 = vsub.f32 %v402, %v522
        %v557 = vsub.f32 %v403, %v522
        %v558 = vsub.f32 %v404, %v527
        %v559 = vsub.f32 %v405, %v527
        %v560 = vsub.f32 %v406, %v532
        %v561 = vsub.f32 %v407, %v532
        %v562 = vsub.f32 %v408, %v537
        %v563 = vsub.f32 %v409, %v537
        %v564 = vsub.f32 %v410, %v542
        %v565 = vsub.f32 %v411, %v542
        %v566 = vsub.f32 %v412, %v547
        %v567 = vsub.f32 %v413, %v547
        %v568 = vsub.f32 %v414, %v552
        %v569 = vsub.f32 %v415, %v552
        %v570 = vmul.f32 %v554, %v554
        %v571 = vmul.f32 %v555, %v555
        %v572 = vmul.f32 %v556, %v556
        %v573 = vmul.f32 %v557, %v557
        %v574 = vmul.f32 %v558, %v558
        %v575 = vmul.f32 %v559, %v559
        %v576 = vmul.f32 %v560, %v560
        %v577 = vmul.f32 %v561, %v561
        %v578 = vmul.f32 %v562, %v562
        %v579 = vmul.f32 %v563, %v563
        %v580 = vmul.f32 %v564, %v564
        %v581 = vmul.f32 %v565, %v565
        %v582 = vmul.f32 %v566, %v566
        %v583 = vmul.f32 %v567, %v567
        %v584 = vmul.f32 %v568, %v568
        %v585 = vmul.f32 %v569, %v569
        %v586 = vadd.f32 %v570, %v571
        %587 = vadd.xlane.f32.xlu0 %v586
        %v588 = vpop.xlane.xlu0 %587
        %v589 = vadd.f32 %v572, %v573
        %590 = vadd.xlane.f32.xlu0 %v589
        %v591 = vpop.xlane.xlu0 %590
        %v592 = vadd.f32 %v574, %v575
        %593 = vadd.xlane.f32.xlu0 %v592
        %v594 = vpop.xlane.xlu0 %593
        %v595 = vadd.f32 %v576, %v577
        %596 = vadd.xlane.f32.xlu0 %v595
        %v597 = vpop.xlane.xlu0 %596
        %v598 = vadd.f32 %v578, %v579
        %599 = vadd.xlane.f32.xlu0 %v598
        %v600 = vpop.xlane.xlu0 %599
        %v601 = vadd.f32 %v580, %v581
        %602 = vadd.xlane.f32.xlu0 %v601
        %v603 = vpop.xlane.xlu0 %602
        %v604 = vadd.f32 %v582, %v583
        %605 = vadd.xlane.f32.xlu0 %v604
        %v606 = vpop.xlane.xlu0 %605
        %v607 = vadd.f32 %v584, %v585
        %608 = vadd.xlane.f32.xlu0 %v607
        %v609 = vpop.xlane.xlu0 %608
        %610 = vmatpush.msra.mxu0 0.0
        %611 = vmatpush.msra.mxu0 0.0
        %612 = vmatpush.msra.mxu0 0.0
        %613 = vmatpush.msra.mxu0 0.0
        %614 = vmatpush.msra.mxu0 0.0
        %615 = vmatpush.msra.mxu0 0.0
        %616 = vmatpush.msra.mxu0 0.0
        %617 = vmatpush.msra.mxu0 0.0
        %618 = vmatpush.msra.mxu0 %v609
        %619 = vmatpush.msra.mxu0 %v606
        %620 = vmatpush.msra.mxu0 %v603
        %621 = vmatpush.msra.mxu0 %v600
        %622 = vmatpush.msra.mxu0 %v597
        %623 = vmatpush.msra.mxu0 %v594
        %624 = vmatpush.msra.mxu0 %v591
        %625 = vmatpush.msra.mxu0 %v588
        %626 = vmatmul.f32.gmra.mxu0 %v450
        %v627 = vpop.f32.mrf.mxu0
        %v628 = vadd.f32 1e-05, %v627
        %629 = vmatmul.f32.gmra.mxu0 %v453
        %v630 = vpop.f32.mrf.mxu0
        %v631 = vadd.f32 1e-05, %v630
        %632 = vmatmul.f32.gmra.mxu0 %v456
        %v633 = vpop.f32.mrf.mxu0
        %v634 = vadd.f32 1e-05, %v633
        %635 = vmatmul.f32.gmra.mxu0 %v459
        %v636 = vpop.f32.mrf.mxu0
        %v637 = vadd.f32 1e-05, %v636
        %638 = vmatmul.f32.gmra.mxu0 %v462
        %v639 = vpop.f32.mrf.mxu0
        %v640 = vadd.f32 1e-05, %v639
        %641 = vmatmul.f32.gmra.mxu0 %v465
        %v642 = vpop.f32.mrf.mxu0
        %v643 = vadd.f32 1e-05, %v642
        %644 = vmatmul.f32.gmra.mxu0 %v468
        %v645 = vpop.f32.mrf.mxu0
        %v646 = vadd.f32 1e-05, %v645
        %647 = vmatmul.f32.gmra.mxu0 %v471
        %v648 = vpop.f32.mrf.mxu0
        %v649 = vadd.f32 1e-05, %v648
        %650 = vdwg.mxu0
        %v651 = vrsqrt.pop %v628
        %v652 = vmul.f32 %v651, %v628
        %v653 = vmul.f32 %v652, %v651
        %v654 = vmul.f32 0.5, %v653
        %v655 = vsub.f32 1.5, %v654
        %v656 = vmul.f32 %v651, %v655
        %vm657 = vweird.f32 %v628
        %vm658 = vweird.f32 %v651
        %vm659 = vmor %vm657, %vm658
        %v660 = vsel %vm659, %v651, %v656
        %v661 = vrsqrt.pop %v631
        %v662 = vmul.f32 %v661, %v631
        %v663 = vmul.f32 %v662, %v661
        %v664 = vmul.f32 0.5, %v663
        %v665 = vsub.f32 1.5, %v664
        %v666 = vmul.f32 %v661, %v665
        %vm667 = vweird.f32 %v631
        %vm668 = vweird.f32 %v661
        %vm669 = vmor %vm667, %vm668
        %v670 = vsel %vm669, %v661, %v666
        %v671 = vrsqrt.pop %v634
        %v672 = vmul.f32 %v671, %v634
        %v673 = vmul.f32 %v672, %v671
        %v674 = vmul.f32 0.5, %v673
        %v675 = vsub.f32 1.5, %v674
        %v676 = vmul.f32 %v671, %v675
        %vm677 = vweird.f32 %v634
        %vm678 = vweird.f32 %v671
        %vm679 = vmor %vm677, %vm678
        %v680 = vsel %vm679, %v671, %v676
        %v681 = vrsqrt.pop %v637
        %v682 = vmul.f32 %v681, %v637
        %v683 = vmul.f32 %v682, %v681
        %v684 = vmul.f32 0.5, %v683
        %v685 = vsub.f32 1.5, %v684
        %v686 = vmul.f32 %v681, %v685
        %vm687 = vweird.f32 %v637
        %vm688 = vweird.f32 %v681
        %vm689 = vmor %vm687, %vm688
        %v690 = vsel %vm689, %v681, %v686
        %v691 = vrsqrt.pop %v640
        %v692 = vmul.f32 %v691, %v640
        %v693 = vmul.f32 %v692, %v691
        %v694 = vmul.f32 0.5, %v693
        %v695 = vsub.f32 1.5, %v694
        %v696 = vmul.f32 %v691, %v695
        %vm697 = vweird.f32 %v640
        %vm698 = vweird.f32 %v691
        %vm699 = vmor %vm697, %vm698
        %v700 = vsel %vm699, %v691, %v696
        %v701 = vrsqrt.pop %v643
        %v702 = vmul.f32 %v701, %v643
        %v703 = vmul.f32 %v702, %v701
        %v704 = vmul.f32 0.5, %v703
        %v705 = vsub.f32 1.5, %v704
        %v706 = vmul.f32 %v701, %v705
        %vm707 = vweird.f32 %v643
        %vm708 = vweird.f32 %v701
        %vm709 = vmor %vm707, %vm708
        %v710 = vsel %vm709, %v701, %v706
        %v711 = vrsqrt.pop %v646
        %v712 = vmul.f32 %v711, %v646
        %v713 = vmul.f32 %v712, %v711
        %v714 = vmul.f32 0.5, %v713
        %v715 = vsub.f32 1.5, %v714
        %v716 = vmul.f32 %v711, %v715
        %vm717 = vweird.f32 %v646
        %vm718 = vweird.f32 %v711
        %vm719 = vmor %vm717, %vm718
        %v720 = vsel %vm719, %v711, %v716
        %v721 = vrsqrt.pop %v649
        %v722 = vmul.f32 %v721, %v649
        %v723 = vmul.f32 %v722, %v721
        %v724 = vmul.f32 0.5, %v723
        %v725 = vsub.f32 1.5, %v724
        %v726 = vmul.f32 %v721, %v725
        %vm727 = vweird.f32 %v649
        %vm728 = vweird.f32 %v721
        %vm729 = vmor %vm727, %vm728
        %v730 = vsel %vm729, %v721, %v726
        %732 = vset.pattern.permute.xlu0 0
        %733 = vperm.xlu0 %732, %v660
        %v734 = vpop.permute.xlu0 %733
        %737 = vset.pattern.permute.xlu0 0
        %738 = vperm.xlu0 %737, %v670
        %v739 = vpop.permute.xlu0 %738
        %742 = vset.pattern.permute.xlu0 0
        %743 = vperm.xlu0 %742, %v680
        %v744 = vpop.permute.xlu0 %743
        %747 = vset.pattern.permute.xlu0 0
        %748 = vperm.xlu0 %747, %v690
        %v749 = vpop.permute.xlu0 %748
        %752 = vset.pattern.permute.xlu0 0
        %753 = vperm.xlu0 %752, %v700
        %v754 = vpop.permute.xlu0 %753
        %757 = vset.pattern.permute.xlu0 0
        %758 = vperm.xlu0 %757, %v710
        %v759 = vpop.permute.xlu0 %758
        %762 = vset.pattern.permute.xlu0 0
        %763 = vperm.xlu0 %762, %v720
        %v764 = vpop.permute.xlu0 %763
        %767 = vset.pattern.permute.xlu0 0
        %768 = vperm.xlu0 %767, %v730
        %v769 = vpop.permute.xlu0 %768
        %v771 = vmul.f32 %v554, %v734
        %v772 = vmul.f32 %v555, %v734
        %v773 = vmul.f32 %v556, %v739
        %v774 = vmul.f32 %v557, %v739
        %v775 = vmul.f32 %v558, %v744
        %v776 = vmul.f32 %v559, %v744
        %v777 = vmul.f32 %v560, %v749
        %v778 = vmul.f32 %v561, %v749
        %v779 = vmul.f32 %v562, %v754
        %v780 = vmul.f32 %v563, %v754
        %v781 = vmul.f32 %v564, %v759
        %v782 = vmul.f32 %v565, %v759
        %v783 = vmul.f32 %v566, %v764
        %v784 = vmul.f32 %v567, %v764
        %v785 = vmul.f32 %v568, %v769
        %v786 = vmul.f32 %v569, %v769
        %v787 = vld [vmem:[%s2] sm:$0xff]
        %v788 = vld [vmem:[%s2 + $0x8] sm:$0xff]
        %v789 = vld [vmem:[%s2 + $0x10] sm:$0xff]
        %v790 = vld [vmem:[%s2 + $0x18] sm:$0xff]
        %v791 = vld [vmem:[%s2 + $0x20] sm:$0xff]
        %v792 = vld [vmem:[%s2 + $0x28] sm:$0xff]
        %v793 = vld [vmem:[%s2 + $0x30] sm:$0xff]
        %v794 = vld [vmem:[%s2 + $0x38] sm:$0xff]
        %796 = vset.pattern.permute.xlu0 0
        %797 = vperm.xlu0 %796, %v787
        %v798 = vpop.permute.xlu0 %797
        %801 = vset.pattern.permute.xlu0 0
        %802 = vperm.xlu0 %801, %v788
        %v803 = vpop.permute.xlu0 %802
        %806 = vset.pattern.permute.xlu0 0
        %807 = vperm.xlu0 %806, %v789
        %v808 = vpop.permute.xlu0 %807
        %811 = vset.pattern.permute.xlu0 0
        %812 = vperm.xlu0 %811, %v790
        %v813 = vpop.permute.xlu0 %812
        %816 = vset.pattern.permute.xlu0 0
        %817 = vperm.xlu0 %816, %v791
        %v818 = vpop.permute.xlu0 %817
        %821 = vset.pattern.permute.xlu0 0
        %822 = vperm.xlu0 %821, %v792
        %v823 = vpop.permute.xlu0 %822
        %826 = vset.pattern.permute.xlu0 0
        %827 = vperm.xlu0 %826, %v793
        %v828 = vpop.permute.xlu0 %827
        %831 = vset.pattern.permute.xlu0 0
        %832 = vperm.xlu0 %831, %v794
        %v833 = vpop.permute.xlu0 %832
        %v835 = vmul.f32 %v771, %v798
        %v836 = vmul.f32 %v772, %v798
        %v837 = vmul.f32 %v773, %v803
        %v838 = vmul.f32 %v774, %v803
        %v839 = vmul.f32 %v775, %v808
        %v840 = vmul.f32 %v776, %v808
        %v841 = vmul.f32 %v777, %v813
        %v842 = vmul.f32 %v778, %v813
        %v843 = vmul.f32 %v779, %v818
        %v844 = vmul.f32 %v780, %v818
        %v845 = vmul.f32 %v781, %v823
        %v846 = vmul.f32 %v782, %v823
        %v847 = vmul.f32 %v783, %v828
        %v848 = vmul.f32 %v784, %v828
        %v849 = vmul.f32 %v785, %v833
        %v850 = vmul.f32 %v786, %v833
        %v851 = vld [vmem:[%s3] sm:$0xff]
        %v852 = vld [vmem:[%s3 + $0x8] sm:$0xff]
        %v853 = vld [vmem:[%s3 + $0x10] sm:$0xff]
        %v854 = vld [vmem:[%s3 + $0x18] sm:$0xff]
        %v855 = vld [vmem:[%s3 + $0x20] sm:$0xff]
        %v856 = vld [vmem:[%s3 + $0x28] sm:$0xff]
        %v857 = vld [vmem:[%s3 + $0x30] sm:$0xff]
        %v858 = vld [vmem:[%s3 + $0x38] sm:$0xff]
        %860 = vset.pattern.permute.xlu0 0
        %861 = vperm.xlu0 %860, %v851
        %v862 = vpop.permute.xlu0 %861
        %865 = vset.pattern.permute.xlu0 0
        %866 = vperm.xlu0 %865, %v852
        %v867 = vpop.permute.xlu0 %866
        %870 = vset.pattern.permute.xlu0 0
        %871 = vperm.xlu0 %870, %v853
        %v872 = vpop.permute.xlu0 %871
        %875 = vset.pattern.permute.xlu0 0
        %876 = vperm.xlu0 %875, %v854
        %v877 = vpop.permute.xlu0 %876
        %880 = vset.pattern.permute.xlu0 0
        %881 = vperm.xlu0 %880, %v855
        %v882 = vpop.permute.xlu0 %881
        %885 = vset.pattern.permute.xlu0 0
        %886 = vperm.xlu0 %885, %v856
        %v887 = vpop.permute.xlu0 %886
        %890 = vset.pattern.permute.xlu0 0
        %891 = vperm.xlu0 %890, %v857
        %v892 = vpop.permute.xlu0 %891
        %895 = vset.pattern.permute.xlu0 0
        %896 = vperm.xlu0 %895, %v858
        %v897 = vpop.permute.xlu0 %896
        %v899 = vadd.f32 %v835, %v862
        %v900 = vadd.f32 %v836, %v862
        %v901 = vadd.f32 %v837, %v867
        %v902 = vadd.f32 %v838, %v867
        %v903 = vadd.f32 %v839, %v872
        %v904 = vadd.f32 %v840, %v872
        %v905 = vadd.f32 %v841, %v877
        %v906 = vadd.f32 %v842, %v877
        %v907 = vadd.f32 %v843, %v882
        %v908 = vadd.f32 %v844, %v882
        %v909 = vadd.f32 %v845, %v887
        %v910 = vadd.f32 %v846, %v887
        %v911 = vadd.f32 %v847, %v892
        %v912 = vadd.f32 %v848, %v892
        %v913 = vadd.f32 %v849, %v897
        %v914 = vadd.f32 %v850, %v897
        %v915 = vxor.u32 %v899, 2147483648
        %v916 = vxor.u32 %v900, 2147483648
        %v917 = vxor.u32 %v901, 2147483648
        %v918 = vxor.u32 %v902, 2147483648
        %v919 = vxor.u32 %v903, 2147483648
        %v920 = vxor.u32 %v904, 2147483648
        %v921 = vxor.u32 %v905, 2147483648
        %v922 = vxor.u32 %v906, 2147483648
        %v923 = vxor.u32 %v907, 2147483648
        %v924 = vxor.u32 %v908, 2147483648
        %v925 = vxor.u32 %v909, 2147483648
        %v926 = vxor.u32 %v910, 2147483648
        %v927 = vxor.u32 %v911, 2147483648
        %v928 = vxor.u32 %v912, 2147483648
        %v929 = vxor.u32 %v913, 2147483648
        %v930 = vxor.u32 %v914, 2147483648
        %v931 = vmul.f32 %v915, 1.442695
        %v932 = vpow.pop %v931
        %v933 = vmul.f32 %v916, 1.442695
        %v934 = vpow.pop %v933
        %v935 = vmul.f32 %v917, 1.442695
        %v936 = vpow.pop %v935
        %v937 = vmul.f32 %v918, 1.442695
        %v938 = vpow.pop %v937
        %v939 = vmul.f32 %v919, 1.442695
        %v940 = vpow.pop %v939
        %v941 = vmul.f32 %v920, 1.442695
        %v942 = vpow.pop %v941
        %v943 = vmul.f32 %v921, 1.442695
        %v944 = vpow.pop %v943
        %v945 = vmul.f32 %v922, 1.442695
        %v946 = vpow.pop %v945
        %v947 = vmul.f32 %v923, 1.442695
        %v948 = vpow.pop %v947
        %v949 = vmul.f32 %v924, 1.442695
        %v950 = vpow.pop %v949
        %v951 = vmul.f32 %v925, 1.442695
        %v952 = vpow.pop %v951
        %v953 = vmul.f32 %v926, 1.442695
        %v954 = vpow.pop %v953
        %v955 = vmul.f32 %v927, 1.442695
        %v956 = vpow.pop %v955
        %v957 = vmul.f32 %v928, 1.442695
        %v958 = vpow.pop %v957
        %v959 = vmul.f32 %v929, 1.442695
        %v960 = vpow.pop %v959
        %v961 = vmul.f32 %v930, 1.442695
        %v962 = vpow.pop %v961
        %v963 = vadd.f32 %v932, 1.0
        %v964 = vadd.f32 %v934, 1.0
        %v965 = vadd.f32 %v936, 1.0
        %v966 = vadd.f32 %v938, 1.0
        %v967 = vadd.f32 %v940, 1.0
        %v968 = vadd.f32 %v942, 1.0
        %v969 = vadd.f32 %v944, 1.0
        %v970 = vadd.f32 %v946, 1.0
        %v971 = vadd.f32 %v948, 1.0
        %v972 = vadd.f32 %v950, 1.0
        %v973 = vadd.f32 %v952, 1.0
        %v974 = vadd.f32 %v954, 1.0
        %v975 = vadd.f32 %v956, 1.0
        %v976 = vadd.f32 %v958, 1.0
        %v977 = vadd.f32 %v960, 1.0
        %v978 = vadd.f32 %v962, 1.0
        %v979 = vrcp.pop %v963
        %v980 = vmul.f32 %v963, %v979
        %v981 = vsub.f32 1.0, %v980
        %v982 = vmul.f32 %v979, %v981
        %v983 = vadd.f32 %v979, %v982
        %vm984 = vweird.f32 %v963
        %vm985 = vweird.f32 %v979
        %vm986 = vmor %vm984, %vm985
        %v987 = vsel %vm986, %v979, %v983
        %v988 = vand.u32 2147483647, %v963
        %vm989 = vcmp.eq.f32.partialorder %v988, 8.507059e+37
        %v990 = vand.u32 %v963, 2147483648
        %v991 = vor.u32 1.1754944e-38, %v990
        %v992 = vsel %vm989, %v991, %v987
        %v993 = vmul.f32 1.0, %v992
        %v994 = vrcp.pop %v964
        %v995 = vmul.f32 %v964, %v994
        %v996 = vsub.f32 1.0, %v995
        %v997 = vmul.f32 %v994, %v996
        %v998 = vadd.f32 %v994, %v997
        %vm999 = vweird.f32 %v964
        %vm1000 = vweird.f32 %v994
        %vm1001 = vmor %vm999, %vm1000
        %v1002 = vsel %vm1001, %v994, %v998
        %v1003 = vand.u32 2147483647, %v964
        %vm1004 = vcmp.eq.f32.partialorder %v1003, 8.507059e+37
        %v1005 = vand.u32 %v964, 2147483648
        %v1006 = vor.u32 1.1754944e-38, %v1005
        %v1007 = vsel %vm1004, %v1006, %v1002
        %v1008 = vmul.f32 1.0, %v1007
        %v1009 = vrcp.pop %v965
        %v1010 = vmul.f32 %v965, %v1009
        %v1011 = vsub.f32 1.0, %v1010
        %v1012 = vmul.f32 %v1009, %v1011
        %v1013 = vadd.f32 %v1009, %v1012
        %vm1014 = vweird.f32 %v965
        %vm1015 = vweird.f32 %v1009
        %vm1016 = vmor %vm1014, %vm1015
        %v1017 = vsel %vm1016, %v1009, %v1013
        %v1018 = vand.u32 2147483647, %v965
        %vm1019 = vcmp.eq.f32.partialorder %v1018, 8.507059e+37
        %v1020 = vand.u32 %v965, 2147483648
        %v1021 = vor.u32 1.1754944e-38, %v1020
        %v1022 = vsel %vm1019, %v1021, %v1017
        %v1023 = vmul.f32 1.0, %v1022
        %v1024 = vrcp.pop %v966
        %v1025 = vmul.f32 %v966, %v1024
        %v1026 = vsub.f32 1.0, %v1025
        %v1027 = vmul.f32 %v1024, %v1026
        %v1028 = vadd.f32 %v1024, %v1027
        %vm1029 = vweird.f32 %v966
        %vm1030 = vweird.f32 %v1024
        %vm1031 = vmor %vm1029, %vm1030
        %v1032 = vsel %vm1031, %v1024, %v1028
        %v1033 = vand.u32 2147483647, %v966
        %vm1034 = vcmp.eq.f32.partialorder %v1033, 8.507059e+37
        %v1035 = vand.u32 %v966, 2147483648
        %v1036 = vor.u32 1.1754944e-38, %v1035
        %v1037 = vsel %vm1034, %v1036, %v1032
        %v1038 = vmul.f32 1.0, %v1037
        %v1039 = vrcp.pop %v967
        %v1040 = vmul.f32 %v967, %v1039
        %v1041 = vsub.f32 1.0, %v1040
        %v1042 = vmul.f32 %v1039, %v1041
        %v1043 = vadd.f32 %v1039, %v1042
        %vm1044 = vweird.f32 %v967
        %vm1045 = vweird.f32 %v1039
        %vm1046 = vmor %vm1044, %vm1045
        %v1047 = vsel %vm1046, %v1039, %v1043
        %v1048 = vand.u32 2147483647, %v967
        %vm1049 = vcmp.eq.f32.partialorder %v1048, 8.507059e+37
        %v1050 = vand.u32 %v967, 2147483648
        %v1051 = vor.u32 1.1754944e-38, %v1050
        %v1052 = vsel %vm1049, %v1051, %v1047
        %v1053 = vmul.f32 1.0, %v1052
        %v1054 = vrcp.pop %v968
        %v1055 = vmul.f32 %v968, %v1054
        %v1056 = vsub.f32 1.0, %v1055
        %v1057 = vmul.f32 %v1054, %v1056
        %v1058 = vadd.f32 %v1054, %v1057
        %vm1059 = vweird.f32 %v968
        %vm1060 = vweird.f32 %v1054
        %vm1061 = vmor %vm1059, %vm1060
        %v1062 = vsel %vm1061, %v1054, %v1058
        %v1063 = vand.u32 2147483647, %v968
        %vm1064 = vcmp.eq.f32.partialorder %v1063, 8.507059e+37
        %v1065 = vand.u32 %v968, 2147483648
        %v1066 = vor.u32 1.1754944e-38, %v1065
        %v1067 = vsel %vm1064, %v1066, %v1062
        %v1068 = vmul.f32 1.0, %v1067
        %v1069 = vrcp.pop %v969
        %v1070 = vmul.f32 %v969, %v1069
        %v1071 = vsub.f32 1.0, %v1070
        %v1072 = vmul.f32 %v1069, %v1071
        %v1073 = vadd.f32 %v1069, %v1072
        %vm1074 = vweird.f32 %v969
        %vm1075 = vweird.f32 %v1069
        %vm1076 = vmor %vm1074, %vm1075
        %v1077 = vsel %vm1076, %v1069, %v1073
        %v1078 = vand.u32 2147483647, %v969
        %vm1079 = vcmp.eq.f32.partialorder %v1078, 8.507059e+37
        %v1080 = vand.u32 %v969, 2147483648
        %v1081 = vor.u32 1.1754944e-38, %v1080
        %v1082 = vsel %vm1079, %v1081, %v1077
        %v1083 = vmul.f32 1.0, %v1082
        %v1084 = vrcp.pop %v970
        %v1085 = vmul.f32 %v970, %v1084
        %v1086 = vsub.f32 1.0, %v1085
        %v1087 = vmul.f32 %v1084, %v1086
        %v1088 = vadd.f32 %v1084, %v1087
        %vm1089 = vweird.f32 %v970
        %vm1090 = vweird.f32 %v1084
        %vm1091 = vmor %vm1089, %vm1090
        %v1092 = vsel %vm1091, %v1084, %v1088
        %v1093 = vand.u32 2147483647, %v970
        %vm1094 = vcmp.eq.f32.partialorder %v1093, 8.507059e+37
        %v1095 = vand.u32 %v970, 2147483648
        %v1096 = vor.u32 1.1754944e-38, %v1095
        %v1097 = vsel %vm1094, %v1096, %v1092
        %v1098 = vmul.f32 1.0, %v1097
        %v1099 = vrcp.pop %v971
        %v1100 = vmul.f32 %v971, %v1099
        %v1101 = vsub.f32 1.0, %v1100
        %v1102 = vmul.f32 %v1099, %v1101
        %v1103 = vadd.f32 %v1099, %v1102
        %vm1104 = vweird.f32 %v971
        %vm1105 = vweird.f32 %v1099
        %vm1106 = vmor %vm1104, %vm1105
        %v1107 = vsel %vm1106, %v1099, %v1103
        %v1108 = vand.u32 2147483647, %v971
        %vm1109 = vcmp.eq.f32.partialorder %v1108, 8.507059e+37
        %v1110 = vand.u32 %v971, 2147483648
        %v1111 = vor.u32 1.1754944e-38, %v1110
        %v1112 = vsel %vm1109, %v1111, %v1107
        %v1113 = vmul.f32 1.0, %v1112
        %v1114 = vrcp.pop %v972
        %v1115 = vmul.f32 %v972, %v1114
        %v1116 = vsub.f32 1.0, %v1115
        %v1117 = vmul.f32 %v1114, %v1116
        %v1118 = vadd.f32 %v1114, %v1117
        %vm1119 = vweird.f32 %v972
        %vm1120 = vweird.f32 %v1114
        %vm1121 = vmor %vm1119, %vm1120
        %v1122 = vsel %vm1121, %v1114, %v1118
        %v1123 = vand.u32 2147483647, %v972
        %vm1124 = vcmp.eq.f32.partialorder %v1123, 8.507059e+37
        %v1125 = vand.u32 %v972, 2147483648
        %v1126 = vor.u32 1.1754944e-38, %v1125
        %v1127 = vsel %vm1124, %v1126, %v1122
        %v1128 = vmul.f32 1.0, %v1127
        %v1129 = vrcp.pop %v973
        %v1130 = vmul.f32 %v973, %v1129
        %v1131 = vsub.f32 1.0, %v1130
        %v1132 = vmul.f32 %v1129, %v1131
        %v1133 = vadd.f32 %v1129, %v1132
        %vm1134 = vweird.f32 %v973
        %vm1135 = vweird.f32 %v1129
        %vm1136 = vmor %vm1134, %vm1135
        %v1137 = vsel %vm1136, %v1129, %v1133
        %v1138 = vand.u32 2147483647, %v973
        %vm1139 = vcmp.eq.f32.partialorder %v1138, 8.507059e+37
        %v1140 = vand.u32 %v973, 2147483648
        %v1141 = vor.u32 1.1754944e-38, %v1140
        %v1142 = vsel %vm1139, %v1141, %v1137
        %v1143 = vmul.f32 1.0, %v1142
        %v1144 = vrcp.pop %v974
        %v1145 = vmul.f32 %v974, %v1144
        %v1146 = vsub.f32 1.0, %v1145
        %v1147 = vmul.f32 %v1144, %v1146
        %v1148 = vadd.f32 %v1144, %v1147
        %vm1149 = vweird.f32 %v974
        %vm1150 = vweird.f32 %v1144
        %vm1151 = vmor %vm1149, %vm1150
        %v1152 = vsel %vm1151, %v1144, %v1148
        %v1153 = vand.u32 2147483647, %v974
        %vm1154 = vcmp.eq.f32.partialorder %v1153, 8.507059e+37
        %v1155 = vand.u32 %v974, 2147483648
        %v1156 = vor.u32 1.1754944e-38, %v1155
        %v1157 = vsel %vm1154, %v1156, %v1152
        %v1158 = vmul.f32 1.0, %v1157
        %v1159 = vrcp.pop %v975
        %v1160 = vmul.f32 %v975, %v1159
        %v1161 = vsub.f32 1.0, %v1160
        %v1162 = vmul.f32 %v1159, %v1161
        %v1163 = vadd.f32 %v1159, %v1162
        %vm1164 = vweird.f32 %v975
        %vm1165 = vweird.f32 %v1159
        %vm1166 = vmor %vm1164, %vm1165
        %v1167 = vsel %vm1166, %v1159, %v1163
        %v1168 = vand.u32 2147483647, %v975
        %vm1169 = vcmp.eq.f32.partialorder %v1168, 8.507059e+37
        %v1170 = vand.u32 %v975, 2147483648
        %v1171 = vor.u32 1.1754944e-38, %v1170
        %v1172 = vsel %vm1169, %v1171, %v1167
        %v1173 = vmul.f32 1.0, %v1172
        %v1174 = vrcp.pop %v976
        %v1175 = vmul.f32 %v976, %v1174
        %v1176 = vsub.f32 1.0, %v1175
        %v1177 = vmul.f32 %v1174, %v1176
        %v1178 = vadd.f32 %v1174, %v1177
        %vm1179 = vweird.f32 %v976
        %vm1180 = vweird.f32 %v1174
        %vm1181 = vmor %vm1179, %vm1180
        %v1182 = vsel %vm1181, %v1174, %v1178
        %v1183 = vand.u32 2147483647, %v976
        %vm1184 = vcmp.eq.f32.partialorder %v1183, 8.507059e+37
        %v1185 = vand.u32 %v976, 2147483648
        %v1186 = vor.u32 1.1754944e-38, %v1185
        %v1187 = vsel %vm1184, %v1186, %v1182
        %v1188 = vmul.f32 1.0, %v1187
        %v1189 = vrcp.pop %v977
        %v1190 = vmul.f32 %v977, %v1189
        %v1191 = vsub.f32 1.0, %v1190
        %v1192 = vmul.f32 %v1189, %v1191
        %v1193 = vadd.f32 %v1189, %v1192
        %vm1194 = vweird.f32 %v977
        %vm1195 = vweird.f32 %v1189
        %vm1196 = vmor %vm1194, %vm1195
        %v1197 = vsel %vm1196, %v1189, %v1193
        %v1198 = vand.u32 2147483647, %v977
        %vm1199 = vcmp.eq.f32.partialorder %v1198, 8.507059e+37
        %v1200 = vand.u32 %v977, 2147483648
        %v1201 = vor.u32 1.1754944e-38, %v1200
        %v1202 = vsel %vm1199, %v1201, %v1197
        %v1203 = vmul.f32 1.0, %v1202
        %v1204 = vrcp.pop %v978
        %v1205 = vmul.f32 %v978, %v1204
        %v1206 = vsub.f32 1.0, %v1205
        %v1207 = vmul.f32 %v1204, %v1206
        %v1208 = vadd.f32 %v1204, %v1207
        %vm1209 = vweird.f32 %v978
        %vm1210 = vweird.f32 %v1204
        %vm1211 = vmor %vm1209, %vm1210
        %v1212 = vsel %vm1211, %v1204, %v1208
        %v1213 = vand.u32 2147483647, %v978
        %vm1214 = vcmp.eq.f32.partialorder %v1213, 8.507059e+37
        %v1215 = vand.u32 %v978, 2147483648
        %v1216 = vor.u32 1.1754944e-38, %v1215
        %v1217 = vsel %vm1214, %v1216, %v1212
        %v1218 = vmul.f32 1.0, %v1217
        %v1219 = vmul.f32 %v899, %v993
        %v1220 = vmul.f32 %v900, %v1008
        %v1221 = vmul.f32 %v901, %v1023
        %v1222 = vmul.f32 %v902, %v1038
        %v1223 = vmul.f32 %v903, %v1053
        %v1224 = vmul.f32 %v904, %v1068
        %v1225 = vmul.f32 %v905, %v1083
        %v1226 = vmul.f32 %v906, %v1098
        %v1227 = vmul.f32 %v907, %v1113
        %v1228 = vmul.f32 %v908, %v1128
        %v1229 = vmul.f32 %v909, %v1143
        %v1230 = vmul.f32 %v910, %v1158
        %v1231 = vmul.f32 %v911, %v1173
        %v1232 = vmul.f32 %v912, %v1188
        %v1233 = vmul.f32 %v913, %v1203
        %v1234 = vmul.f32 %v914, %v1218
        %1235 = vrot.lane.b32.xlu0 %v1219, 17
        %v1236 = vpop.permute.xlu0 %1235
        %1237 = vrot.lane.b32.xlu0 %v1221, 17
        %v1238 = vpop.permute.xlu0 %1237
        %1239 = vrot.lane.b32.xlu0 %v1223, 17
        %v1240 = vpop.permute.xlu0 %1239
        %1241 = vrot.lane.b32.xlu0 %v1225, 17
        %v1242 = vpop.permute.xlu0 %1241
        %1243 = vrot.lane.b32.xlu0 %v1227, 17
        %v1244 = vpop.permute.xlu0 %1243
        %1245 = vrot.lane.b32.xlu0 %v1229, 17
        %v1246 = vpop.permute.xlu0 %1245
        %1247 = vrot.lane.b32.xlu0 %v1231, 17
        %v1248 = vpop.permute.xlu0 %1247
        %1249 = vrot.lane.b32.xlu0 %v1233, 17
        %v1250 = vpop.permute.xlu0 %1249
        %1251 = vrot.lane.b32.xlu0 %v1220, 17
        %v1252 = vpop.permute.xlu0 %1251
        %1253 = vrot.lane.b32.xlu0 %v1222, 17
        %v1254 = vpop.permute.xlu0 %1253
        %1255 = vrot.lane.b32.xlu0 %v1224, 17
        %v1256 = vpop.permute.xlu0 %1255
        %1257 = vrot.lane.b32.xlu0 %v1226, 17
        %v1258 = vpop.permute.xlu0 %1257
        %1259 = vrot.lane.b32.xlu0 %v1228, 17
        %v1260 = vpop.permute.xlu0 %1259
        %1261 = vrot.lane.b32.xlu0 %v1230, 17
        %v1262 = vpop.permute.xlu0 %1261
        %1263 = vrot.lane.b32.xlu0 %v1232, 17
        %v1264 = vpop.permute.xlu0 %1263
        %1265 = vrot.lane.b32.xlu0 %v1234, 17
        %v1266 = vpop.permute.xlu0 %1265
        %v1267 = vlaneseq
        %v1268 = vand.u32 %v1267, 127
        %vm1269 = vcmp.lt.s32.totalorder %v1268, 17
        %v1270 = vsel %vm1269, %v1236, %v1252
        %v1271 = vsel %vm1269, %v1238, %v1254
        %v1272 = vsel %vm1269, %v1240, %v1256
        %v1273 = vsel %vm1269, %v1242, %v1258
        %v1274 = vsel %vm1269, %v1244, %v1260
        %v1275 = vsel %vm1269, %v1246, %v1262
        %v1276 = vsel %vm1269, %v1248, %v1264
        %v1277 = vsel %vm1269, %v1250, %v1266
        %v1278 = vsel %vm1269, %v1252, %v1236
        %v1279 = vsel %vm1269, %v1254, %v1238
        %v1280 = vsel %vm1269, %v1256, %v1240
        %v1281 = vsel %vm1269, %v1258, %v1242
        %v1282 = vsel %vm1269, %v1260, %v1244
        %v1283 = vsel %vm1269, %v1262, %v1246
        %v1284 = vsel %vm1269, %v1264, %v1248
        %v1285 = vsel %vm1269, %v1266, %v1250
        %v1286 = vld [vmem:[#allocation5] sm:$0x3]
        %v1288 = vperm.slane %v1286, 0
        %v1289 = vperm.slane %v1286, 1
        %v1292 = vmul.f32 %v1278, %v1288
        %v1293 = vmul.f32 %v1270, %v1289
        %v1294 = vmul.f32 %v1279, %v1288
        %v1295 = vmul.f32 %v1271, %v1289
        %v1296 = vmul.f32 %v1280, %v1288
        %v1297 = vmul.f32 %v1272, %v1289
        %v1298 = vmul.f32 %v1281, %v1288
        %v1299 = vmul.f32 %v1273, %v1289
        %v1300 = vmul.f32 %v1282, %v1288
        %v1301 = vmul.f32 %v1274, %v1289
        %v1302 = vmul.f32 %v1283, %v1288
        %v1303 = vmul.f32 %v1275, %v1289
        %v1304 = vmul.f32 %v1284, %v1288
        %v1305 = vmul.f32 %v1276, %v1289
        %v1306 = vmul.f32 %v1285, %v1288
        %v1307 = vmul.f32 %v1277, %v1289
        %v1308 = vpack.c.bf16 %v1293, %v1292
        %v1309 = vpack.c.bf16 %v1295, %v1294
        %v1310 = vpack.c.bf16 %v1297, %v1296
        %v1311 = vpack.c.bf16 %v1299, %v1298
        %v1312 = vpack.c.bf16 %v1301, %v1300
        %v1313 = vpack.c.bf16 %v1303, %v1302
        %v1314 = vpack.c.bf16 %v1305, %v1304
        %v1315 = vpack.c.bf16 %v1307, %v1306
        %1316 = vrot.lane.b32.xlu0 %v1219, 16
        %v1317 = vpop.permute.xlu0 %1316
        %1318 = vrot.lane.b32.xlu0 %v1221, 16
        %v1319 = vpop.permute.xlu0 %1318
        %1320 = vrot.lane.b32.xlu0 %v1223, 16
        %v1321 = vpop.permute.xlu0 %1320
        %1322 = vrot.lane.b32.xlu0 %v1225, 16
        %v1323 = vpop.permute.xlu0 %1322
        %1324 = vrot.lane.b32.xlu0 %v1227, 16
        %v1325 = vpop.permute.xlu0 %1324
        %1326 = vrot.lane.b32.xlu0 %v1229, 16
        %v1327 = vpop.permute.xlu0 %1326
        %1328 = vrot.lane.b32.xlu0 %v1231, 16
        %v1329 = vpop.permute.xlu0 %1328
        %1330 = vrot.lane.b32.xlu0 %v1233, 16
        %v1331 = vpop.permute.xlu0 %1330
        %1332 = vrot.lane.b32.xlu0 %v1220, 16
        %v1333 = vpop.permute.xlu0 %1332
        %1334 = vrot.lane.b32.xlu0 %v1222, 16
        %v1335 = vpop.permute.xlu0 %1334
        %1336 = vrot.lane.b32.xlu0 %v1224, 16
        %v1337 = vpop.permute.xlu0 %1336
        %1338 = vrot.lane.b32.xlu0 %v1226, 16
        %v1339 = vpop.permute.xlu0 %1338
        %1340 = vrot.lane.b32.xlu0 %v1228, 16
        %v1341 = vpop.permute.xlu0 %1340
        %1342 = vrot.lane.b32.xlu0 %v1230, 16
        %v1343 = vpop.permute.xlu0 %1342
        %1344 = vrot.lane.b32.xlu0 %v1232, 16
        %v1345 = vpop.permute.xlu0 %1344
        %1346 = vrot.lane.b32.xlu0 %v1234, 16
        %v1347 = vpop.permute.xlu0 %1346
        %vm1348 = vcmp.lt.s32.totalorder %v1268, 16
        %v1349 = vsel %vm1348, %v1317, %v1333
        %v1350 = vsel %vm1348, %v1319, %v1335
        %v1351 = vsel %vm1348, %v1321, %v1337
        %v1352 = vsel %vm1348, %v1323, %v1339
        %v1353 = vsel %vm1348, %v1325, %v1341
        %v1354 = vsel %vm1348, %v1327, %v1343
        %v1355 = vsel %vm1348, %v1329, %v1345
        %v1356 = vsel %vm1348, %v1331, %v1347
        %v1357 = vsel %vm1348, %v1333, %v1317
        %v1358 = vsel %vm1348, %v1335, %v1319
        %v1359 = vsel %vm1348, %v1337, %v1321
        %v1360 = vsel %vm1348, %v1339, %v1323
        %v1361 = vsel %vm1348, %v1341, %v1325
        %v1362 = vsel %vm1348, %v1343, %v1327
        %v1363 = vsel %vm1348, %v1345, %v1329
        %v1364 = vsel %vm1348, %v1347, %v1331
        %s1365 = scalar_lea.vmem [#allocation5], 2
        %v1366 = vld [vmem:[%s1365] sm:$0x3]
        %v1368 = vperm.slane %v1366, 0
        %v1369 = vperm.slane %v1366, 1
        %v1372 = vmul.f32 %v1357, %v1368
        %v1373 = vmul.f32 %v1349, %v1369
        %v1374 = vmul.f32 %v1358, %v1368
        %v1375 = vmul.f32 %v1350, %v1369
        %v1376 = vmul.f32 %v1359, %v1368
        %v1377 = vmul.f32 %v1351, %v1369
        %v1378 = vmul.f32 %v1360, %v1368
        %v1379 = vmul.f32 %v1352, %v1369
        %v1380 = vmul.f32 %v1361, %v1368
        %v1381 = vmul.f32 %v1353, %v1369
        %v1382 = vmul.f32 %v1362, %v1368
        %v1383 = vmul.f32 %v1354, %v1369
        %v1384 = vmul.f32 %v1363, %v1368
        %v1385 = vmul.f32 %v1355, %v1369
        %v1386 = vmul.f32 %v1364, %v1368
        %v1387 = vmul.f32 %v1356, %v1369
        %v1388 = vpack.c.bf16 %v1373, %v1372
        %v1389 = vpack.c.bf16 %v1375, %v1374
        %v1390 = vpack.c.bf16 %v1377, %v1376
        %v1391 = vpack.c.bf16 %v1379, %v1378
        %v1392 = vpack.c.bf16 %v1381, %v1380
        %v1393 = vpack.c.bf16 %v1383, %v1382
        %v1394 = vpack.c.bf16 %v1385, %v1384
        %v1395 = vpack.c.bf16 %v1387, %v1386
        %1396 = vrot.lane.b32.xlu0 %v1219, 15
        %v1397 = vpop.permute.xlu0 %1396
        %1398 = vrot.lane.b32.xlu0 %v1221, 15
        %v1399 = vpop.permute.xlu0 %1398
        %1400 = vrot.lane.b32.xlu0 %v1223, 15
        %v1401 = vpop.permute.xlu0 %1400
        %1402 = vrot.lane.b32.xlu0 %v1225, 15
        %v1403 = vpop.permute.xlu0 %1402
        %1404 = vrot.lane.b32.xlu0 %v1227, 15
        %v1405 = vpop.permute.xlu0 %1404
        %1406 = vrot.lane.b32.xlu0 %v1229, 15
        %v1407 = vpop.permute.xlu0 %1406
        %1408 = vrot.lane.b32.xlu0 %v1231, 15
        %v1409 = vpop.permute.xlu0 %1408
        %1410 = vrot.lane.b32.xlu0 %v1233, 15
        %v1411 = vpop.permute.xlu0 %1410
        %1412 = vrot.lane.b32.xlu0 %v1220, 15
        %v1413 = vpop.permute.xlu0 %1412
        %1414 = vrot.lane.b32.xlu0 %v1222, 15
        %v1415 = vpop.permute.xlu0 %1414
        %1416 = vrot.lane.b32.xlu0 %v1224, 15
        %v1417 = vpop.permute.xlu0 %1416
        %1418 = vrot.lane.b32.xlu0 %v1226, 15
        %v1419 = vpop.permute.xlu0 %1418
        %1420 = vrot.lane.b32.xlu0 %v1228, 15
        %v1421 = vpop.permute.xlu0 %1420
        %1422 = vrot.lane.b32.xlu0 %v1230, 15
        %v1423 = vpop.permute.xlu0 %1422
        %1424 = vrot.lane.b32.xlu0 %v1232, 15
        %v1425 = vpop.permute.xlu0 %1424
        %1426 = vrot.lane.b32.xlu0 %v1234, 15
        %v1427 = vpop.permute.xlu0 %1426
        %vm1428 = vcmp.lt.s32.totalorder %v1268, 15
        %v1429 = vsel %vm1428, %v1397, %v1413
        %v1430 = vsel %vm1428, %v1399, %v1415
        %v1431 = vsel %vm1428, %v1401, %v1417
        %v1432 = vsel %vm1428, %v1403, %v1419
        %v1433 = vsel %vm1428, %v1405, %v1421
        %v1434 = vsel %vm1428, %v1407, %v1423
        %v1435 = vsel %vm1428, %v1409, %v1425
        %v1436 = vsel %vm1428, %v1411, %v1427
        %v1437 = vsel %vm1428, %v1413, %v1397
        %v1438 = vsel %vm1428, %v1415, %v1399
        %v1439 = vsel %vm1428, %v1417, %v1401
        %v1440 = vsel %vm1428, %v1419, %v1403
        %v1441 = vsel %vm1428, %v1421, %v1405
        %v1442 = vsel %vm1428, %v1423, %v1407
        %v1443 = vsel %vm1428, %v1425, %v1409
        %v1444 = vsel %vm1428, %v1427, %v1411
        %s1445 = scalar_lea.vmem [#allocation5], 4
        %v1446 = vld [vmem:[%s1445] sm:$0x3]
        %v1448 = vperm.slane %v1446, 0
        %v1449 = vperm.slane %v1446, 1
        %v1452 = vmul.f32 %v1437, %v1448
        %v1453 = vmul.f32 %v1429, %v1449
        %v1454 = vmul.f32 %v1438, %v1448
        %v1455 = vmul.f32 %v1430, %v1449
        %v1456 = vmul.f32 %v1439, %v1448
        %v1457 = vmul.f32 %v1431, %v1449
        %v1458 = vmul.f32 %v1440, %v1448
        %v1459 = vmul.f32 %v1432, %v1449
        %v1460 = vmul.f32 %v1441, %v1448
        %v1461 = vmul.f32 %v1433, %v1449
        %v1462 = vmul.f32 %v1442, %v1448
        %v1463 = vmul.f32 %v1434, %v1449
        %v1464 = vmul.f32 %v1443, %v1448
        %v1465 = vmul.f32 %v1435, %v1449
        %v1466 = vmul.f32 %v1444, %v1448
        %v1467 = vmul.f32 %v1436, %v1449
        %v1468 = vpack.c.bf16 %v1453, %v1452
        %v1469 = vpack.c.bf16 %v1455, %v1454
        %v1470 = vpack.c.bf16 %v1457, %v1456
        %v1471 = vpack.c.bf16 %v1459, %v1458
        %v1472 = vpack.c.bf16 %v1461, %v1460
        %v1473 = vpack.c.bf16 %v1463, %v1462
        %v1474 = vpack.c.bf16 %v1465, %v1464
        %v1475 = vpack.c.bf16 %v1467, %v1466
        %1476 = vrot.lane.b32.xlu0 %v1219, 1
        %v1477 = vpop.permute.xlu0 %1476
        %1478 = vrot.lane.b32.xlu0 %v1221, 1
        %v1479 = vpop.permute.xlu0 %1478
        %1480 = vrot.lane.b32.xlu0 %v1223, 1
        %v1481 = vpop.permute.xlu0 %1480
        %1482 = vrot.lane.b32.xlu0 %v1225, 1
        %v1483 = vpop.permute.xlu0 %1482
        %1484 = vrot.lane.b32.xlu0 %v1227, 1
        %v1485 = vpop.permute.xlu0 %1484
        %1486 = vrot.lane.b32.xlu0 %v1229, 1
        %v1487 = vpop.permute.xlu0 %1486
        %1488 = vrot.lane.b32.xlu0 %v1231, 1
        %v1489 = vpop.permute.xlu0 %1488
        %1490 = vrot.lane.b32.xlu0 %v1233, 1
        %v1491 = vpop.permute.xlu0 %1490
        %1492 = vrot.lane.b32.xlu0 %v1220, 1
        %v1493 = vpop.permute.xlu0 %1492
        %1494 = vrot.lane.b32.xlu0 %v1222, 1
        %v1495 = vpop.permute.xlu0 %1494
        %1496 = vrot.lane.b32.xlu0 %v1224, 1
        %v1497 = vpop.permute.xlu0 %1496
        %1498 = vrot.lane.b32.xlu0 %v1226, 1
        %v1499 = vpop.permute.xlu0 %1498
        %1500 = vrot.lane.b32.xlu0 %v1228, 1
        %v1501 = vpop.permute.xlu0 %1500
        %1502 = vrot.lane.b32.xlu0 %v1230, 1
        %v1503 = vpop.permute.xlu0 %1502
        %1504 = vrot.lane.b32.xlu0 %v1232, 1
        %v1505 = vpop.permute.xlu0 %1504
        %1506 = vrot.lane.b32.xlu0 %v1234, 1
        %v1507 = vpop.permute.xlu0 %1506
        %vm1508 = vcmp.lt.s32.totalorder %v1268, 1
        %v1509 = vsel %vm1508, %v1477, %v1493
        %v1510 = vsel %vm1508, %v1479, %v1495
        %v1511 = vsel %vm1508, %v1481, %v1497
        %v1512 = vsel %vm1508, %v1483, %v1499
        %v1513 = vsel %vm1508, %v1485, %v1501
        %v1514 = vsel %vm1508, %v1487, %v1503
        %v1515 = vsel %vm1508, %v1489, %v1505
        %v1516 = vsel %vm1508, %v1491, %v1507
        %v1517 = vsel %vm1508, %v1493, %v1477
        %v1518 = vsel %vm1508, %v1495, %v1479
        %v1519 = vsel %vm1508, %v1497, %v1481
        %v1520 = vsel %vm1508, %v1499, %v1483
        %v1521 = vsel %vm1508, %v1501, %v1485
        %v1522 = vsel %vm1508, %v1503, %v1487
        %v1523 = vsel %vm1508, %v1505, %v1489
        %v1524 = vsel %vm1508, %v1507, %v1491
        %s1525 = scalar_lea.vmem [#allocation5], 6
        %v1526 = vld [vmem:[%s1525] sm:$0x3]
        %v1528 = vperm.slane %v1526, 0
        %v1529 = vperm.slane %v1526, 1
        %v1532 = vmul.f32 %v1517, %v1528
        %v1533 = vmul.f32 %v1509, %v1529
        %v1534 = vmul.f32 %v1518, %v1528
        %v1535 = vmul.f32 %v1510, %v1529
        %v1536 = vmul.f32 %v1519, %v1528
        %v1537 = vmul.f32 %v1511, %v1529
        %v1538 = vmul.f32 %v1520, %v1528
        %v1539 = vmul.f32 %v1512, %v1529
        %v1540 = vmul.f32 %v1521, %v1528
        %v1541 = vmul.f32 %v1513, %v1529
        %v1542 = vmul.f32 %v1522, %v1528
        %v1543 = vmul.f32 %v1514, %v1529
        %v1544 = vmul.f32 %v1523, %v1528
        %v1545 = vmul.f32 %v1515, %v1529
        %v1546 = vmul.f32 %v1524, %v1528
        %v1547 = vmul.f32 %v1516, %v1529
        %v1548 = vpack.c.bf16 %v1533, %v1532
        %v1549 = vpack.c.bf16 %v1535, %v1534
        %v1550 = vpack.c.bf16 %v1537, %v1536
        %v1551 = vpack.c.bf16 %v1539, %v1538
        %v1552 = vpack.c.bf16 %v1541, %v1540
        %v1553 = vpack.c.bf16 %v1543, %v1542
        %v1554 = vpack.c.bf16 %v1545, %v1544
        %v1555 = vpack.c.bf16 %v1547, %v1546
        %v1556 = vpack.c.bf16 %v1220, %v1219
        %v1557 = vpack.c.bf16 %v1222, %v1221
        %v1558 = vpack.c.bf16 %v1224, %v1223
        %v1559 = vpack.c.bf16 %v1226, %v1225
        %v1560 = vpack.c.bf16 %v1228, %v1227
        %v1561 = vpack.c.bf16 %v1230, %v1229
        %v1562 = vpack.c.bf16 %v1232, %v1231
        %v1563 = vpack.c.bf16 %v1234, %v1233
        %1564 = vrot.lane.b32.xlu0 %v1219, 127
        %v1565 = vpop.permute.xlu0 %1564
        %1566 = vrot.lane.b32.xlu0 %v1221, 127
        %v1567 = vpop.permute.xlu0 %1566
        %1568 = vrot.lane.b32.xlu0 %v1223, 127
        %v1569 = vpop.permute.xlu0 %1568
        %1570 = vrot.lane.b32.xlu0 %v1225, 127
        %v1571 = vpop.permute.xlu0 %1570
        %1572 = vrot.lane.b32.xlu0 %v1227, 127
        %v1573 = vpop.permute.xlu0 %1572
        %1574 = vrot.lane.b32.xlu0 %v1229, 127
        %v1575 = vpop.permute.xlu0 %1574
        %1576 = vrot.lane.b32.xlu0 %v1231, 127
        %v1577 = vpop.permute.xlu0 %1576
        %1578 = vrot.lane.b32.xlu0 %v1233, 127
        %v1579 = vpop.permute.xlu0 %1578
        %1580 = vrot.lane.b32.xlu0 %v1220, 127
        %v1581 = vpop.permute.xlu0 %1580
        %1582 = vrot.lane.b32.xlu0 %v1222, 127
        %v1583 = vpop.permute.xlu0 %1582
        %1584 = vrot.lane.b32.xlu0 %v1224, 127
        %v1585 = vpop.permute.xlu0 %1584
        %1586 = vrot.lane.b32.xlu0 %v1226, 127
        %v1587 = vpop.permute.xlu0 %1586
        %1588 = vrot.lane.b32.xlu0 %v1228, 127
        %v1589 = vpop.permute.xlu0 %1588
        %1590 = vrot.lane.b32.xlu0 %v1230, 127
        %v1591 = vpop.permute.xlu0 %1590
        %1592 = vrot.lane.b32.xlu0 %v1232, 127
        %v1593 = vpop.permute.xlu0 %1592
        %1594 = vrot.lane.b32.xlu0 %v1234, 127
        %v1595 = vpop.permute.xlu0 %1594
        %vm1596 = vcmp.lt.s32.totalorder %v1268, 127
        %v1597 = vsel %vm1596, %v1565, %v1581
        %v1598 = vsel %vm1596, %v1567, %v1583
        %v1599 = vsel %vm1596, %v1569, %v1585
        %v1600 = vsel %vm1596, %v1571, %v1587
        %v1601 = vsel %vm1596, %v1573, %v1589
        %v1602 = vsel %vm1596, %v1575, %v1591
        %v1603 = vsel %vm1596, %v1577, %v1593
        %v1604 = vsel %vm1596, %v1579, %v1595
        %v1605 = vsel %vm1596, %v1581, %v1565
        %v1606 = vsel %vm1596, %v1583, %v1567
        %v1607 = vsel %vm1596, %v1585, %v1569
        %v1608 = vsel %vm1596, %v1587, %v1571
        %v1609 = vsel %vm1596, %v1589, %v1573
        %v1610 = vsel %vm1596, %v1591, %v1575
        %v1611 = vsel %vm1596, %v1593, %v1577
        %v1612 = vsel %vm1596, %v1595, %v1579
        %s1613 = scalar_lea.vmem [#allocation5], 10
        %v1614 = vld [vmem:[%s1613] sm:$0x3]
        %v1616 = vperm.slane %v1614, 0
        %v1617 = vperm.slane %v1614, 1
        %v1620 = vmul.f32 %v1597, %v1616
        %v1621 = vmul.f32 %v1605, %v1617
        %v1622 = vmul.f32 %v1598, %v1616
        %v1623 = vmul.f32 %v1606, %v1617
        %v1624 = vmul.f32 %v1599, %v1616
        %v1625 = vmul.f32 %v1607, %v1617
        %v1626 = vmul.f32 %v1600, %v1616
        %v1627 = vmul.f32 %v1608, %v1617
        %v1628 = vmul.f32 %v1601, %v1616
        %v1629 = vmul.f32 %v1609, %v1617
        %v1630 = vmul.f32 %v1602, %v1616
        %v1631 = vmul.f32 %v1610, %v1617
        %v1632 = vmul.f32 %v1603, %v1616
        %v1633 = vmul.f32 %v1611, %v1617
        %v1634 = vmul.f32 %v1604, %v1616
        %v1635 = vmul.f32 %v1612, %v1617
        %v1636 = vpack.c.bf16 %v1621, %v1620
        %v1637 = vpack.c.bf16 %v1623, %v1622
        %v1638 = vpack.c.bf16 %v1625, %v1624
        %v1639 = vpack.c.bf16 %v1627, %v1626
        %v1640 = vpack.c.bf16 %v1629, %v1628
        %v1641 = vpack.c.bf16 %v1631, %v1630
        %v1642 = vpack.c.bf16 %v1633, %v1632
        %v1643 = vpack.c.bf16 %v1635, %v1634
        %1644 = vrot.lane.b32.xlu0 %v1219, 113
        %v1645 = vpop.permute.xlu0 %1644
        %1646 = vrot.lane.b32.xlu0 %v1221, 113
        %v1647 = vpop.permute.xlu0 %1646
        %1648 = vrot.lane.b32.xlu0 %v1223, 113
        %v1649 = vpop.permute.xlu0 %1648
        %1650 = vrot.lane.b32.xlu0 %v1225, 113
        %v1651 = vpop.permute.xlu0 %1650
        %1652 = vrot.lane.b32.xlu0 %v1227, 113
        %v1653 = vpop.permute.xlu0 %1652
        %1654 = vrot.lane.b32.xlu0 %v1229, 113
        %v1655 = vpop.permute.xlu0 %1654
        %1656 = vrot.lane.b32.xlu0 %v1231, 113
        %v1657 = vpop.permute.xlu0 %1656
        %1658 = vrot.lane.b32.xlu0 %v1233, 113
        %v1659 = vpop.permute.xlu0 %1658
        %1660 = vrot.lane.b32.xlu0 %v1220, 113
        %v1661 = vpop.permute.xlu0 %1660
        %1662 = vrot.lane.b32.xlu0 %v1222, 113
        %v1663 = vpop.permute.xlu0 %1662
        %1664 = vrot.lane.b32.xlu0 %v1224, 113
        %v1665 = vpop.permute.xlu0 %1664
        %1666 = vrot.lane.b32.xlu0 %v1226, 113
        %v1667 = vpop.permute.xlu0 %1666
        %1668 = vrot.lane.b32.xlu0 %v1228, 113
        %v1669 = vpop.permute.xlu0 %1668
        %1670 = vrot.lane.b32.xlu0 %v1230, 113
        %v1671 = vpop.permute.xlu0 %1670
        %1672 = vrot.lane.b32.xlu0 %v1232, 113
        %v1673 = vpop.permute.xlu0 %1672
        %1674 = vrot.lane.b32.xlu0 %v1234, 113
        %v1675 = vpop.permute.xlu0 %1674
        %vm1676 = vcmp.lt.s32.totalorder %v1268, 113
        %v1677 = vsel %vm1676, %v1645, %v1661
        %v1678 = vsel %vm1676, %v1647, %v1663
        %v1679 = vsel %vm1676, %v1649, %v1665
        %v1680 = vsel %vm1676, %v1651, %v1667
        %v1681 = vsel %vm1676, %v1653, %v1669
        %v1682 = vsel %vm1676, %v1655, %v1671
        %v1683 = vsel %vm1676, %v1657, %v1673
        %v1684 = vsel %vm1676, %v1659, %v1675
        %v1685 = vsel %vm1676, %v1661, %v1645
        %v1686 = vsel %vm1676, %v1663, %v1647
        %v1687 = vsel %vm1676, %v1665, %v1649
        %v1688 = vsel %vm1676, %v1667, %v1651
        %v1689 = vsel %vm1676, %v1669, %v1653
        %v1690 = vsel %vm1676, %v1671, %v1655
        %v1691 = vsel %vm1676, %v1673, %v1657
        %v1692 = vsel %vm1676, %v1675, %v1659
        %s1693 = scalar_lea.vmem [#allocation5], 12
        %v1694 = vld [vmem:[%s1693] sm:$0x3]
        %v1696 = vperm.slane %v1694, 0
        %v1697 = vperm.slane %v1694, 1
        %v1700 = vmul.f32 %v1677, %v1696
        %v1701 = vmul.f32 %v1685, %v1697
        %v1702 = vmul.f32 %v1678, %v1696
        %v1703 = vmul.f32 %v1686, %v1697
        %v1704 = vmul.f32 %v1679, %v1696
        %v1705 = vmul.f32 %v1687, %v1697
        %v1706 = vmul.f32 %v1680, %v1696
        %v1707 = vmul.f32 %v1688, %v1697
        %v1708 = vmul.f32 %v1681, %v1696
        %v1709 = vmul.f32 %v1689, %v1697
        %v1710 = vmul.f32 %v1682, %v1696
        %v1711 = vmul.f32 %v1690, %v1697
        %v1712 = vmul.f32 %v1683, %v1696
        %v1713 = vmul.f32 %v1691, %v1697
        %v1714 = vmul.f32 %v1684, %v1696
        %v1715 = vmul.f32 %v1692, %v1697
        %v1716 = vpack.c.bf16 %v1701, %v1700
        %v1717 = vpack.c.bf16 %v1703, %v1702
        %v1718 = vpack.c.bf16 %v1705, %v1704
        %v1719 = vpack.c.bf16 %v1707, %v1706
        %v1720 = vpack.c.bf16 %v1709, %v1708
        %v1721 = vpack.c.bf16 %v1711, %v1710
        %v1722 = vpack.c.bf16 %v1713, %v1712
        %v1723 = vpack.c.bf16 %v1715, %v1714
        %1724 = vrot.lane.b32.xlu0 %v1219, 112
        %v1725 = vpop.permute.xlu0 %1724
        %1726 = vrot.lane.b32.xlu0 %v1221, 112
        %v1727 = vpop.permute.xlu0 %1726
        %1728 = vrot.lane.b32.xlu0 %v1223, 112
        %v1729 = vpop.permute.xlu0 %1728
        %1730 = vrot.lane.b32.xlu0 %v1225, 112
        %v1731 = vpop.permute.xlu0 %1730
        %1732 = vrot.lane.b32.xlu0 %v1227, 112
        %v1733 = vpop.permute.xlu0 %1732
        %1734 = vrot.lane.b32.xlu0 %v1229, 112
        %v1735 = vpop.permute.xlu0 %1734
        %1736 = vrot.lane.b32.xlu0 %v1231, 112
        %v1737 = vpop.permute.xlu0 %1736
        %1738 = vrot.lane.b32.xlu0 %v1233, 112
        %v1739 = vpop.permute.xlu0 %1738
        %1740 = vrot.lane.b32.xlu0 %v1220, 112
        %v1741 = vpop.permute.xlu0 %1740
        %1742 = vrot.lane.b32.xlu0 %v1222, 112
        %v1743 = vpop.permute.xlu0 %1742
        %1744 = vrot.lane.b32.xlu0 %v1224, 112
        %v1745 = vpop.permute.xlu0 %1744
        %1746 = vrot.lane.b32.xlu0 %v1226, 112
        %v1747 = vpop.permute.xlu0 %1746
        %1748 = vrot.lane.b32.xlu0 %v1228, 112
        %v1749 = vpop.permute.xlu0 %1748
        %1750 = vrot.lane.b32.xlu0 %v1230, 112
        %v1751 = vpop.permute.xlu0 %1750
        %1752 = vrot.lane.b32.xlu0 %v1232, 112
        %v1753 = vpop.permute.xlu0 %1752
        %1754 = vrot.lane.b32.xlu0 %v1234, 112
        %v1755 = vpop.permute.xlu0 %1754
        %vm1756 = vcmp.lt.s32.totalorder %v1268, 112
        %v1757 = vsel %vm1756, %v1725, %v1741
        %v1758 = vsel %vm1756, %v1727, %v1743
        %v1759 = vsel %vm1756, %v1729, %v1745
        %v1760 = vsel %vm1756, %v1731, %v1747
        %v1761 = vsel %vm1756, %v1733, %v1749
        %v1762 = vsel %vm1756, %v1735, %v1751
        %v1763 = vsel %vm1756, %v1737, %v1753
        %v1764 = vsel %vm1756, %v1739, %v1755
        %v1765 = vsel %vm1756, %v1741, %v1725
        %v1766 = vsel %vm1756, %v1743, %v1727
        %v1767 = vsel %vm1756, %v1745, %v1729
        %v1768 = vsel %vm1756, %v1747, %v1731
        %v1769 = vsel %vm1756, %v1749, %v1733
        %v1770 = vsel %vm1756, %v1751, %v1735
        %v1771 = vsel %vm1756, %v1753, %v1737
        %v1772 = vsel %vm1756, %v1755, %v1739
        %s1773 = scalar_lea.vmem [#allocation5], 14
        %v1774 = vld [vmem:[%s1773] sm:$0x3]
        %v1776 = vperm.slane %v1774, 0
        %v1777 = vperm.slane %v1774, 1
        %v1780 = vmul.f32 %v1757, %v1776
        %v1781 = vmul.f32 %v1765, %v1777
        %v1782 = vmul.f32 %v1758, %v1776
        %v1783 = vmul.f32 %v1766, %v1777
        %v1784 = vmul.f32 %v1759, %v1776
        %v1785 = vmul.f32 %v1767, %v1777
        %v1786 = vmul.f32 %v1760, %v1776
        %v1787 = vmul.f32 %v1768, %v1777
        %v1788 = vmul.f32 %v1761, %v1776
        %v1789 = vmul.f32 %v1769, %v1777
        %v1790 = vmul.f32 %v1762, %v1776
        %v1791 = vmul.f32 %v1770, %v1777
        %v1792 = vmul.f32 %v1763, %v1776
        %v1793 = vmul.f32 %v1771, %v1777
        %v1794 = vmul.f32 %v1764, %v1776
        %v1795 = vmul.f32 %v1772, %v1777
        %v1796 = vpack.c.bf16 %v1781, %v1780
        %v1797 = vpack.c.bf16 %v1783, %v1782
        %v1798 = vpack.c.bf16 %v1785, %v1784
        %v1799 = vpack.c.bf16 %v1787, %v1786
        %v1800 = vpack.c.bf16 %v1789, %v1788
        %v1801 = vpack.c.bf16 %v1791, %v1790
        %v1802 = vpack.c.bf16 %v1793, %v1792
        %v1803 = vpack.c.bf16 %v1795, %v1794
        %1804 = vrot.lane.b32.xlu0 %v1219, 111
        %v1805 = vpop.permute.xlu0 %1804
        %1806 = vrot.lane.b32.xlu0 %v1221, 111
        %v1807 = vpop.permute.xlu0 %1806
        %1808 = vrot.lane.b32.xlu0 %v1223, 111
        %v1809 = vpop.permute.xlu0 %1808
        %1810 = vrot.lane.b32.xlu0 %v1225, 111
        %v1811 = vpop.permute.xlu0 %1810
        %1812 = vrot.lane.b32.xlu0 %v1227, 111
        %v1813 = vpop.permute.xlu0 %1812
        %1814 = vrot.lane.b32.xlu0 %v1229, 111
        %v1815 = vpop.permute.xlu0 %1814
        %1816 = vrot.lane.b32.xlu0 %v1231, 111
        %v1817 = vpop.permute.xlu0 %1816
        %1818 = vrot.lane.b32.xlu0 %v1233, 111
        %v1819 = vpop.permute.xlu0 %1818
        %1820 = vrot.lane.b32.xlu0 %v1220, 111
        %v1821 = vpop.permute.xlu0 %1820
        %1822 = vrot.lane.b32.xlu0 %v1222, 111
        %v1823 = vpop.permute.xlu0 %1822
        %1824 = vrot.lane.b32.xlu0 %v1224, 111
        %v1825 = vpop.permute.xlu0 %1824
        %1826 = vrot.lane.b32.xlu0 %v1226, 111
        %v1827 = vpop.permute.xlu0 %1826
        %1828 = vrot.lane.b32.xlu0 %v1228, 111
        %v1829 = vpop.permute.xlu0 %1828
        %1830 = vrot.lane.b32.xlu0 %v1230, 111
        %v1831 = vpop.permute.xlu0 %1830
        %1832 = vrot.lane.b32.xlu0 %v1232, 111
        %v1833 = vpop.permute.xlu0 %1832
        %1834 = vrot.lane.b32.xlu0 %v1234, 111
        %v1835 = vpop.permute.xlu0 %1834
        %vm1836 = vcmp.lt.s32.totalorder %v1268, 111
        %v1837 = vsel %vm1836, %v1805, %v1821
        %v1838 = vsel %vm1836, %v1807, %v1823
        %v1839 = vsel %vm1836, %v1809, %v1825
        %v1840 = vsel %vm1836, %v1811, %v1827
        %v1841 = vsel %vm1836, %v1813, %v1829
        %v1842 = vsel %vm1836, %v1815, %v1831
        %v1843 = vsel %vm1836, %v1817, %v1833
        %v1844 = vsel %vm1836, %v1819, %v1835
        %v1845 = vsel %vm1836, %v1821, %v1805
        %v1846 = vsel %vm1836, %v1823, %v1807
        %v1847 = vsel %vm1836, %v1825, %v1809
        %v1848 = vsel %vm1836, %v1827, %v1811
        %v1849 = vsel %vm1836, %v1829, %v1813
        %v1850 = vsel %vm1836, %v1831, %v1815
        %v1851 = vsel %vm1836, %v1833, %v1817
        %v1852 = vsel %vm1836, %v1835, %v1819
        %s1853 = scalar_lea.vmem [#allocation5], 16
        %v1854 = vld [vmem:[%s1853] sm:$0x3]
        %v1856 = vperm.slane %v1854, 0
        %v1857 = vperm.slane %v1854, 1
        %v1860 = vmul.f32 %v1837, %v1856
        %v1861 = vmul.f32 %v1845, %v1857
        %v1862 = vmul.f32 %v1838, %v1856
        %v1863 = vmul.f32 %v1846, %v1857
        %v1864 = vmul.f32 %v1839, %v1856
        %v1865 = vmul.f32 %v1847, %v1857
        %v1866 = vmul.f32 %v1840, %v1856
        %v1867 = vmul.f32 %v1848, %v1857
        %v1868 = vmul.f32 %v1841, %v1856
        %v1869 = vmul.f32 %v1849, %v1857
        %v1870 = vmul.f32 %v1842, %v1856
        %v1871 = vmul.f32 %v1850, %v1857
        %v1872 = vmul.f32 %v1843, %v1856
        %v1873 = vmul.f32 %v1851, %v1857
        %v1874 = vmul.f32 %v1844, %v1856
        %v1875 = vmul.f32 %v1852, %v1857
        %v1876 = vpack.c.bf16 %v1861, %v1860
        %v1877 = vpack.c.bf16 %v1863, %v1862
        %v1878 = vpack.c.bf16 %v1865, %v1864
        %v1879 = vpack.c.bf16 %v1867, %v1866
        %v1880 = vpack.c.bf16 %v1869, %v1868
        %v1881 = vpack.c.bf16 %v1871, %v1870
        %v1882 = vpack.c.bf16 %v1873, %v1872
        %v1883 = vpack.c.bf16 %v1875, %v1874
        %v1884 = vpack.c.bf16 %v401, %v400
        %v1885 = vpack.c.bf16 %v403, %v402
        %v1886 = vpack.c.bf16 %v405, %v404
        %v1887 = vpack.c.bf16 %v407, %v406
        %v1888 = vpack.c.bf16 %v409, %v408
        %v1889 = vpack.c.bf16 %v411, %v410
        %v1890 = vpack.c.bf16 %v413, %v412
        %v1891 = vpack.c.bf16 %v415, %v414
        %v1900 = vunpack.c.l.b16 %v1308
        %v1901 = vunpack.c.h.b16 %v1308
        %v1902 = vunpack.c.l.b16 %v1309
        %v1903 = vunpack.c.h.b16 %v1309
        %v1904 = vunpack.c.l.b16 %v1310
        %v1905 = vunpack.c.h.b16 %v1310
        %v1906 = vunpack.c.l.b16 %v1311
        %v1907 = vunpack.c.h.b16 %v1311
        %v1908 = vunpack.c.l.b16 %v1312
        %v1909 = vunpack.c.h.b16 %v1312
        %v1910 = vunpack.c.l.b16 %v1313
        %v1911 = vunpack.c.h.b16 %v1313
        %v1912 = vunpack.c.l.b16 %v1314
        %v1913 = vunpack.c.h.b16 %v1314
        %v1914 = vunpack.c.l.b16 %v1315
        %v1915 = vunpack.c.h.b16 %v1315
        %v1916 = vpack.c.b16 %v1902, %v1900
        %v1917 = vpack.c.b16 %v1903, %v1901
        %v1918 = vpack.c.b16 %v1906, %v1904
        %v1919 = vpack.c.b16 %v1907, %v1905
        %v1920 = vpack.c.b16 %v1910, %v1908
        %v1921 = vpack.c.b16 %v1911, %v1909
        %v1922 = vpack.c.b16 %v1914, %v1912
        %v1923 = vpack.c.b16 %v1915, %v1913
        %v1940 = vunpack.c.l.b16 %v1388
        %v1941 = vunpack.c.h.b16 %v1388
        %v1942 = vunpack.c.l.b16 %v1389
        %v1943 = vunpack.c.h.b16 %v1389
        %v1944 = vunpack.c.l.b16 %v1390
        %v1945 = vunpack.c.h.b16 %v1390
        %v1946 = vunpack.c.l.b16 %v1391
        %v1947 = vunpack.c.h.b16 %v1391
        %v1948 = vunpack.c.l.b16 %v1392
        %v1949 = vunpack.c.h.b16 %v1392
        %v1950 = vunpack.c.l.b16 %v1393
        %v1951 = vunpack.c.h.b16 %v1393
        %v1952 = vunpack.c.l.b16 %v1394
        %v1953 = vunpack.c.h.b16 %v1394
        %v1954 = vunpack.c.l.b16 %v1395
        %v1955 = vunpack.c.h.b16 %v1395
        %v1956 = vpack.c.b16 %v1942, %v1940
        %v1957 = vpack.c.b16 %v1943, %v1941
        %v1958 = vpack.c.b16 %v1946, %v1944
        %v1959 = vpack.c.b16 %v1947, %v1945
        %v1960 = vpack.c.b16 %v1950, %v1948
        %v1961 = vpack.c.b16 %v1951, %v1949
        %v1962 = vpack.c.b16 %v1954, %v1952
        %v1963 = vpack.c.b16 %v1955, %v1953
        %v1980 = vunpack.c.l.b16 %v1468
        %v1981 = vunpack.c.h.b16 %v1468
        %v1982 = vunpack.c.l.b16 %v1469
        %v1983 = vunpack.c.h.b16 %v1469
        %v1984 = vunpack.c.l.b16 %v1470
        %v1985 = vunpack.c.h.b16 %v1470
        %v1986 = vunpack.c.l.b16 %v1471
        %v1987 = vunpack.c.h.b16 %v1471
        %v1988 = vunpack.c.l.b16 %v1472
        %v1989 = vunpack.c.h.b16 %v1472
        %v1990 = vunpack.c.l.b16 %v1473
        %v1991 = vunpack.c.h.b16 %v1473
        %v1992 = vunpack.c.l.b16 %v1474
        %v1993 = vunpack.c.h.b16 %v1474
        %v1994 = vunpack.c.l.b16 %v1475
        %v1995 = vunpack.c.h.b16 %v1475
        %v1996 = vpack.c.b16 %v1982, %v1980
        %v1997 = vpack.c.b16 %v1983, %v1981
        %v1998 = vpack.c.b16 %v1986, %v1984
        %v1999 = vpack.c.b16 %v1987, %v1985
        %v2000 = vpack.c.b16 %v1990, %v1988
        %v2001 = vpack.c.b16 %v1991, %v1989
        %v2002 = vpack.c.b16 %v1994, %v1992
        %v2003 = vpack.c.b16 %v1995, %v1993
        %v2020 = vunpack.c.l.b16 %v1548
        %v2021 = vunpack.c.h.b16 %v1548
        %v2022 = vunpack.c.l.b16 %v1549
        %v2023 = vunpack.c.h.b16 %v1549
        %v2024 = vunpack.c.l.b16 %v1550
        %v2025 = vunpack.c.h.b16 %v1550
        %v2026 = vunpack.c.l.b16 %v1551
        %v2027 = vunpack.c.h.b16 %v1551
        %v2028 = vunpack.c.l.b16 %v1552
        %v2029 = vunpack.c.h.b16 %v1552
        %v2030 = vunpack.c.l.b16 %v1553
        %v2031 = vunpack.c.h.b16 %v1553
        %v2032 = vunpack.c.l.b16 %v1554
        %v2033 = vunpack.c.h.b16 %v1554
        %v2034 = vunpack.c.l.b16 %v1555
        %v2035 = vunpack.c.h.b16 %v1555
        %v2036 = vpack.c.b16 %v2022, %v2020
        %v2037 = vpack.c.b16 %v2023, %v2021
        %v2038 = vpack.c.b16 %v2026, %v2024
        %v2039 = vpack.c.b16 %v2027, %v2025
        %v2040 = vpack.c.b16 %v2030, %v2028
        %v2041 = vpack.c.b16 %v2031, %v2029
        %v2042 = vpack.c.b16 %v2034, %v2032
        %v2043 = vpack.c.b16 %v2035, %v2033
        %v2060 = vunpack.c.l.b16 %v1556
        %v2061 = vunpack.c.h.b16 %v1556
        %v2062 = vunpack.c.l.b16 %v1557
        %v2063 = vunpack.c.h.b16 %v1557
        %v2064 = vunpack.c.l.b16 %v1558
        %v2065 = vunpack.c.h.b16 %v1558
        %v2066 = vunpack.c.l.b16 %v1559
        %v2067 = vunpack.c.h.b16 %v1559
        %v2068 = vunpack.c.l.b16 %v1560
        %v2069 = vunpack.c.h.b16 %v1560
        %v2070 = vunpack.c.l.b16 %v1561
        %v2071 = vunpack.c.h.b16 %v1561
        %v2072 = vunpack.c.l.b16 %v1562
        %v2073 = vunpack.c.h.b16 %v1562
        %v2074 = vunpack.c.l.b16 %v1563
        %v2075 = vunpack.c.h.b16 %v1563
        %v2076 = vpack.c.b16 %v2062, %v2060
        %v2077 = vpack.c.b16 %v2063, %v2061
        %v2078 = vpack.c.b16 %v2066, %v2064
        %v2079 = vpack.c.b16 %v2067, %v2065
        %v2080 = vpack.c.b16 %v2070, %v2068
        %v2081 = vpack.c.b16 %v2071, %v2069
        %v2082 = vpack.c.b16 %v2074, %v2072
        %v2083 = vpack.c.b16 %v2075, %v2073
        %v2100 = vunpack.c.l.b16 %v1636
        %v2101 = vunpack.c.h.b16 %v1636
        %v2102 = vunpack.c.l.b16 %v1637
        %v2103 = vunpack.c.h.b16 %v1637
        %v2104 = vunpack.c.l.b16 %v1638
        %v2105 = vunpack.c.h.b16 %v1638
        %v2106 = vunpack.c.l.b16 %v1639
        %v2107 = vunpack.c.h.b16 %v1639
        %v2108 = vunpack.c.l.b16 %v1640
        %v2109 = vunpack.c.h.b16 %v1640
        %v2110 = vunpack.c.l.b16 %v1641
        %v2111 = vunpack.c.h.b16 %v1641
        %v2112 = vunpack.c.l.b16 %v1642
        %v2113 = vunpack.c.h.b16 %v1642
        %v2114 = vunpack.c.l.b16 %v1643
        %v2115 = vunpack.c.h.b16 %v1643
        %v2116 = vpack.c.b16 %v2102, %v2100
        %v2117 = vpack.c.b16 %v2103, %v2101
        %v2118 = vpack.c.b16 %v2106, %v2104
        %v2119 = vpack.c.b16 %v2107, %v2105
        %v2120 = vpack.c.b16 %v2110, %v2108
        %v2121 = vpack.c.b16 %v2111, %v2109
        %v2122 = vpack.c.b16 %v2114, %v2112
        %v2123 = vpack.c.b16 %v2115, %v2113
        %v2140 = vunpack.c.l.b16 %v1716
        %v2141 = vunpack.c.h.b16 %v1716
        %v2142 = vunpack.c.l.b16 %v1717
        %v2143 = vunpack.c.h.b16 %v1717
        %v2144 = vunpack.c.l.b16 %v1718
        %v2145 = vunpack.c.h.b16 %v1718
        %v2146 = vunpack.c.l.b16 %v1719
        %v2147 = vunpack.c.h.b16 %v1719
        %v2148 = vunpack.c.l.b16 %v1720
        %v2149 = vunpack.c.h.b16 %v1720
        %v2150 = vunpack.c.l.b16 %v1721
        %v2151 = vunpack.c.h.b16 %v1721
        %v2152 = vunpack.c.l.b16 %v1722
        %v2153 = vunpack.c.h.b16 %v1722
        %v2154 = vunpack.c.l.b16 %v1723
        %v2155 = vunpack.c.h.b16 %v1723
        %v2156 = vpack.c.b16 %v2142, %v2140
        %v2157 = vpack.c.b16 %v2143, %v2141
        %v2158 = vpack.c.b16 %v2146, %v2144
        %v2159 = vpack.c.b16 %v2147, %v2145
        %v2160 = vpack.c.b16 %v2150, %v2148
        %v2161 = vpack.c.b16 %v2151, %v2149
        %v2162 = vpack.c.b16 %v2154, %v2152
        %v2163 = vpack.c.b16 %v2155, %v2153
        %v2180 = vunpack.c.l.b16 %v1796
        %v2181 = vunpack.c.h.b16 %v1796
        %v2182 = vunpack.c.l.b16 %v1797
        %v2183 = vunpack.c.h.b16 %v1797
        %v2184 = vunpack.c.l.b16 %v1798
        %v2185 = vunpack.c.h.b16 %v1798
        %v2186 = vunpack.c.l.b16 %v1799
        %v2187 = vunpack.c.h.b16 %v1799
        %v2188 = vunpack.c.l.b16 %v1800
        %v2189 = vunpack.c.h.b16 %v1800
        %v2190 = vunpack.c.l.b16 %v1801
        %v2191 = vunpack.c.h.b16 %v1801
        %v2192 = vunpack.c.l.b16 %v1802
        %v2193 = vunpack.c.h.b16 %v1802
        %v2194 = vunpack.c.l.b16 %v1803
        %v2195 = vunpack.c.h.b16 %v1803
        %v2196 = vpack.c.b16 %v2182, %v2180
        %v2197 = vpack.c.b16 %v2183, %v2181
        %v2198 = vpack.c.b16 %v2186, %v2184
        %v2199 = vpack.c.b16 %v2187, %v2185
        %v2200 = vpack.c.b16 %v2190, %v2188
        %v2201 = vpack.c.b16 %v2191, %v2189
        %v2202 = vpack.c.b16 %v2194, %v2192
        %v2203 = vpack.c.b16 %v2195, %v2193
        %v2220 = vunpack.c.l.b16 %v1876
        %v2221 = vunpack.c.h.b16 %v1876
        %v2222 = vunpack.c.l.b16 %v1877
        %v2223 = vunpack.c.h.b16 %v1877
        %v2224 = vunpack.c.l.b16 %v1878
        %v2225 = vunpack.c.h.b16 %v1878
        %v2226 = vunpack.c.l.b16 %v1879
        %v2227 = vunpack.c.h.b16 %v1879
        %v2228 = vunpack.c.l.b16 %v1880
        %v2229 = vunpack.c.h.b16 %v1880
        %v2230 = vunpack.c.l.b16 %v1881
        %v2231 = vunpack.c.h.b16 %v1881
        %v2232 = vunpack.c.l.b16 %v1882
        %v2233 = vunpack.c.h.b16 %v1882
        %v2234 = vunpack.c.l.b16 %v1883
        %v2235 = vunpack.c.h.b16 %v1883
        %v2236 = vpack.c.b16 %v2222, %v2220
        %v2237 = vpack.c.b16 %v2223, %v2221
        %v2238 = vpack.c.b16 %v2226, %v2224
        %v2239 = vpack.c.b16 %v2227, %v2225
        %v2240 = vpack.c.b16 %v2230, %v2228
        %v2241 = vpack.c.b16 %v2231, %v2229
        %v2242 = vpack.c.b16 %v2234, %v2232
        %v2243 = vpack.c.b16 %v2235, %v2233
        %v2260 = vunpack.c.l.b16 %v1884
        %v2261 = vunpack.c.h.b16 %v1884
        %v2262 = vunpack.c.l.b16 %v1885
        %v2263 = vunpack.c.h.b16 %v1885
        %v2264 = vunpack.c.l.b16 %v1886
        %v2265 = vunpack.c.h.b16 %v1886
        %v2266 = vunpack.c.l.b16 %v1887
        %v2267 = vunpack.c.h.b16 %v1887
        %v2268 = vunpack.c.l.b16 %v1888
        %v2269 = vunpack.c.h.b16 %v1888
        %v2270 = vunpack.c.l.b16 %v1889
        %v2271 = vunpack.c.h.b16 %v1889
        %v2272 = vunpack.c.l.b16 %v1890
        %v2273 = vunpack.c.h.b16 %v1890
        %v2274 = vunpack.c.l.b16 %v1891
        %v2275 = vunpack.c.h.b16 %v1891
        %v2276 = vpack.c.b16 %v2262, %v2260
        %v2277 = vpack.c.b16 %v2263, %v2261
        %v2278 = vpack.c.b16 %v2266, %v2264
        %v2279 = vpack.c.b16 %v2267, %v2265
        %v2280 = vpack.c.b16 %v2270, %v2268
        %v2281 = vpack.c.b16 %v2271, %v2269
        %v2282 = vpack.c.b16 %v2274, %v2272
        %v2283 = vpack.c.b16 %v2275, %v2273
        %v2292 = vld [vmem:[%s4] sm:$0xff]
        %v2293 = vld [vmem:[%s4 + $0x8] sm:$0xff]
        %v2294 = vld [vmem:[%s4 + $0x10] sm:$0xf]
        %v2295 = vld [vmem:[%s4 + $0x14] sm:$0xff]
        %v2296 = vld [vmem:[%s4 + $0x1c] sm:$0xff]
        %v2297 = vld [vmem:[%s4 + $0x24] sm:$0xf]
        %v2298 = vld [vmem:[%s4 + $0x28] sm:$0xff]
        %v2299 = vld [vmem:[%s4 + $0x30] sm:$0xff]
        %v2300 = vld [vmem:[%s4 + $0x38] sm:$0xf]
        %v2301 = vld [vmem:[%s4 + $0x3c] sm:$0xff]
        %v2302 = vld [vmem:[%s4 + $0x44] sm:$0xff]
        %v2303 = vld [vmem:[%s4 + $0x4c] sm:$0xf]
        %v2304 = vld [vmem:[%s399] sm:$0x1]
        %v2305 = vxor.u32 %v2304, 2147483648
        %v2306 = vmul.f32 %v2305, 1.442695
        %v2307 = vpow.pop %v2306
        %v2308 = vadd.f32 %v2307, 1.0
        %v2309 = vrcp.pop %v2308
        %v2310 = vmul.f32 %v2308, %v2309
        %v2311 = vsub.f32 1.0, %v2310
        %v2312 = vmul.f32 %v2309, %v2311
        %v2313 = vadd.f32 %v2309, %v2312
        %vm2314 = vweird.f32 %v2308
        %vm2315 = vweird.f32 %v2309
        %vm2316 = vmor %vm2314, %vm2315
        %v2317 = vsel %vm2316, %v2309, %v2313
        %v2318 = vand.u32 2147483647, %v2308
        %vm2319 = vcmp.eq.f32.partialorder %v2318, 8.507059e+37
        %v2320 = vand.u32 %v2308, 2147483648
        %v2321 = vor.u32 1.1754944e-38, %v2320
        %v2322 = vsel %vm2319, %v2321, %v2317
        %v2323 = vmul.f32 1.0, %v2322
        %v2324 = vmul.f32 %v2304, %v2323
        %v2325 = vld [vmem:[#allocation7] sm:$0xff]
        %v2326 = vld [vmem:[#allocation7 + $0x8] sm:$0xff]
        %v2327 = vld [vmem:[#allocation7 + $0x10] sm:$0xff]
        %v2328 = vld [vmem:[#allocation7 + $0x18] sm:$0xff]
        %v2330 = vperm.slane %v2324, 0
        %v2332 = vmul.f32 %v2325, %v2330
        %v2333 = vmul.f32 %v2326, %v2330
        %v2334 = vmul.f32 %v2327, %v2330
        %v2335 = vmul.f32 %v2328, %v2330
        %2336 = vadd.xlane.f32.xlu0 %v2332
        %v2337 = vpop.xlane.xlu0 %2336
        %2338 = vadd.xlane.f32.xlu0 %v2333
        %v2339 = vpop.xlane.xlu0 %2338
        %2340 = vadd.xlane.f32.xlu0 %v2334
        %v2341 = vpop.xlane.xlu0 %2340
        %2342 = vadd.xlane.f32.xlu0 %v2335
        %v2343 = vpop.xlane.xlu0 %2342
        %v2356 = vunpack.c.l.b16 %v2292
        %v2357 = vunpack.c.h.b16 %v2292
        %v2358 = vunpack.c.l.b16 %v2293
        %v2359 = vunpack.c.h.b16 %v2293
        %v2360 = vunpack.c.l.b16 %v2294
        %v2361 = vunpack.c.l.b16 %v2295
        %v2362 = vunpack.c.h.b16 %v2295
        %v2363 = vunpack.c.l.b16 %v2296
        %v2364 = vunpack.c.h.b16 %v2296
        %v2365 = vunpack.c.l.b16 %v2297
        %v2366 = vunpack.c.l.b16 %v2298
        %v2367 = vunpack.c.h.b16 %v2298
        %v2368 = vunpack.c.l.b16 %v2299
        %v2369 = vunpack.c.h.b16 %v2299
        %v2370 = vunpack.c.l.b16 %v2300
        %v2371 = vunpack.c.l.b16 %v2301
        %v2372 = vunpack.c.h.b16 %v2301
        %v2373 = vunpack.c.l.b16 %v2302
        %v2374 = vunpack.c.h.b16 %v2302
        %v2375 = vunpack.c.l.b16 %v2303
        %v2376 = vpack.c.b16 %v2361, %v2356
        %v2377 = vpack.c.b16 %v2362, %v2357
        %v2378 = vpack.c.b16 %v2363, %v2358
        %v2379 = vpack.c.b16 %v2364, %v2359
        %v2380 = vpack.c.b16 %v2365, %v2360
        %v2381 = vpack.c.b16 %v2371, %v2366
        %v2382 = vpack.c.b16 %v2372, %v2367
        %v2383 = vpack.c.b16 %v2373, %v2368
        %v2384 = vpack.c.b16 %v2374, %v2369
        %v2385 = vpack.c.b16 %v2375, %v2370
        %2396 = vmatpush.bf16.msra.mxu0 %v1962
        %2397 = vmatpush.bf16.msra.mxu0 %v1960
        %2398 = vmatpush.bf16.msra.mxu0 %v1958
        %2399 = vmatpush.bf16.msra.mxu0 %v1956
        %2400 = vmatpush.bf16.msra.mxu0 %v1922
        %2401 = vmatpush.bf16.msra.mxu0 %v1920
        %2402 = vmatpush.bf16.msra.mxu0 %v1918
        %2403 = vmatpush.bf16.msra.mxu0 %v1916
        %2404 = vmatmul.bf16.gmra.mxu0 %v2376
        %v2405 = vpop.f32.mrf.mxu0
        %v2406 = vadd.f32 %v2337, %v2405
        %v2407 = vpop.f32.mrf.mxu0
        %v2408 = vadd.f32 %v2339, %v2407
        %2409 = vmatmul.bf16.gmra.mxu0 %v2381
        %v2410 = vpop.f32.mrf.mxu0
        %v2411 = vadd.f32 %v2341, %v2410
        %v2412 = vpop.f32.mrf.mxu0
        %v2413 = vadd.f32 %v2343, %v2412
        %2414 = vdwg.mxu0
        %2415 = vmatpush.bf16.msra.mxu0 %v2042
        %2416 = vmatpush.bf16.msra.mxu0 %v2040
        %2417 = vmatpush.bf16.msra.mxu0 %v2038
        %2418 = vmatpush.bf16.msra.mxu0 %v2036
        %2419 = vmatpush.bf16.msra.mxu0 %v2002
        %2420 = vmatpush.bf16.msra.mxu0 %v2000
        %2421 = vmatpush.bf16.msra.mxu0 %v1998
        %2422 = vmatpush.bf16.msra.mxu0 %v1996
        %2423 = vmatmul.bf16.gmra.mxu0 %v2377
        %v2424 = vpop.f32.mrf.mxu0
        %v2425 = vadd.f32 %v2406, %v2424
        %v2426 = vpop.f32.mrf.mxu0
        %v2427 = vadd.f32 %v2408, %v2426
        %2428 = vmatmul.bf16.gmra.mxu0 %v2382
        %v2429 = vpop.f32.mrf.mxu0
        %v2430 = vadd.f32 %v2411, %v2429
        %v2431 = vpop.f32.mrf.mxu0
        %v2432 = vadd.f32 %v2413, %v2431
        %2433 = vdwg.mxu0
        %2434 = vmatpush.bf16.msra.mxu0 %v2122
        %2435 = vmatpush.bf16.msra.mxu0 %v2120
        %2436 = vmatpush.bf16.msra.mxu0 %v2118
        %2437 = vmatpush.bf16.msra.mxu0 %v2116
        %2438 = vmatpush.bf16.msra.mxu0 %v2082
        %2439 = vmatpush.bf16.msra.mxu0 %v2080
        %2440 = vmatpush.bf16.msra.mxu0 %v2078
        %2441 = vmatpush.bf16.msra.mxu0 %v2076
        %2442 = vmatmul.bf16.gmra.mxu0 %v2378
        %v2443 = vpop.f32.mrf.mxu0
        %v2444 = vadd.f32 %v2425, %v2443
        %v2445 = vpop.f32.mrf.mxu0
        %v2446 = vadd.f32 %v2427, %v2445
        %2447 = vmatmul.bf16.gmra.mxu0 %v2383
        %v2448 = vpop.f32.mrf.mxu0
        %v2449 = vadd.f32 %v2430, %v2448
        %v2450 = vpop.f32.mrf.mxu0
        %v2451 = vadd.f32 %v2432, %v2450
        %2452 = vdwg.mxu0
        %2453 = vmatpush.bf16.msra.mxu0 %v2202
        %2454 = vmatpush.bf16.msra.mxu0 %v2200
        %2455 = vmatpush.bf16.msra.mxu0 %v2198
        %2456 = vmatpush.bf16.msra.mxu0 %v2196
        %2457 = vmatpush.bf16.msra.mxu0 %v2162
        %2458 = vmatpush.bf16.msra.mxu0 %v2160
        %2459 = vmatpush.bf16.msra.mxu0 %v2158
        %2460 = vmatpush.bf16.msra.mxu0 %v2156
        %2461 = vmatmul.bf16.gmra.mxu0 %v2379
        %v2462 = vpop.f32.mrf.mxu0
        %v2463 = vadd.f32 %v2444, %v2462
        %v2464 = vpop.f32.mrf.mxu0
        %v2465 = vadd.f32 %v2446, %v2464
        %2466 = vmatmul.bf16.gmra.mxu0 %v2384
        %v2467 = vpop.f32.mrf.mxu0
        %v2468 = vadd.f32 %v2449, %v2467
        %v2469 = vpop.f32.mrf.mxu0
        %v2470 = vadd.f32 %v2451, %v2469
        %2471 = vdwg.mxu0
        %2472 = vmatpush.bf16.msra.mxu0 %v2282
        %2473 = vmatpush.bf16.msra.mxu0 %v2280
        %2474 = vmatpush.bf16.msra.mxu0 %v2278
        %2475 = vmatpush.bf16.msra.mxu0 %v2276
        %2476 = vmatpush.bf16.msra.mxu0 %v2242
        %2477 = vmatpush.bf16.msra.mxu0 %v2240
        %2478 = vmatpush.bf16.msra.mxu0 %v2238
        %2479 = vmatpush.bf16.msra.mxu0 %v2236
        %2480 = vmatmul.bf16.gmra.mxu0 %v2380
        %v2481 = vpop.f32.mrf.mxu0
        %v2482 = vadd.f32 %v2463, %v2481
        %v2483 = vpop.f32.mrf.mxu0
        %v2484 = vadd.f32 %v2465, %v2483
        %2485 = vmatmul.bf16.gmra.mxu0 %v2385
        %v2486 = vpop.f32.mrf.mxu0
        %v2487 = vadd.f32 %v2468, %v2486
        %v2488 = vpop.f32.mrf.mxu0
        %v2489 = vadd.f32 %v2470, %v2488
        %2490 = vdwg.mxu0
        %2491 = vmatpush.bf16.msra.mxu0 %v1963
        %2492 = vmatpush.bf16.msra.mxu0 %v1961
        %2493 = vmatpush.bf16.msra.mxu0 %v1959
        %2494 = vmatpush.bf16.msra.mxu0 %v1957
        %2495 = vmatpush.bf16.msra.mxu0 %v1923
        %2496 = vmatpush.bf16.msra.mxu0 %v1921
        %2497 = vmatpush.bf16.msra.mxu0 %v1919
        %2498 = vmatpush.bf16.msra.mxu0 %v1917
        %2499 = vmatmul.bf16.gmra.mxu0 %v2376
        %v2500 = vpop.f32.mrf.mxu0
        %v2501 = vadd.f32 %v2337, %v2500
        %v2502 = vpop.f32.mrf.mxu0
        %v2503 = vadd.f32 %v2339, %v2502
        %2504 = vmatmul.bf16.gmra.mxu0 %v2381
        %v2505 = vpop.f32.mrf.mxu0
        %v2506 = vadd.f32 %v2341, %v2505
        %v2507 = vpop.f32.mrf.mxu0
        %v2508 = vadd.f32 %v2343, %v2507
        %2509 = vdwg.mxu0
        %2510 = vmatpush.bf16.msra.mxu0 %v2043
        %2511 = vmatpush.bf16.msra.mxu0 %v2041
        %2512 = vmatpush.bf16.msra.mxu0 %v2039
        %2513 = vmatpush.bf16.msra.mxu0 %v2037
        %2514 = vmatpush.bf16.msra.mxu0 %v2003
        %2515 = vmatpush.bf16.msra.mxu0 %v2001
        %2516 = vmatpush.bf16.msra.mxu0 %v1999
        %2517 = vmatpush.bf16.msra.mxu0 %v1997
        %2518 = vmatmul.bf16.gmra.mxu0 %v2377
        %v2519 = vpop.f32.mrf.mxu0
        %v2520 = vadd.f32 %v2501, %v2519
        %v2521 = vpop.f32.mrf.mxu0
        %v2522 = vadd.f32 %v2503, %v2521
        %2523 = vmatmul.bf16.gmra.mxu0 %v2382
        %v2524 = vpop.f32.mrf.mxu0
        %v2525 = vadd.f32 %v2506, %v2524
        %v2526 = vpop.f32.mrf.mxu0
        %v2527 = vadd.f32 %v2508, %v2526
        %2528 = vdwg.mxu0
        %2529 = vmatpush.bf16.msra.mxu0 %v2123
        %2530 = vmatpush.bf16.msra.mxu0 %v2121
        %2531 = vmatpush.bf16.msra.mxu0 %v2119
        %2532 = vmatpush.bf16.msra.mxu0 %v2117
        %2533 = vmatpush.bf16.msra.mxu0 %v2083
        %2534 = vmatpush.bf16.msra.mxu0 %v2081
        %2535 = vmatpush.bf16.msra.mxu0 %v2079
        %2536 = vmatpush.bf16.msra.mxu0 %v2077
        %2537 = vmatmul.bf16.gmra.mxu0 %v2378
        %v2538 = vpop.f32.mrf.mxu0
        %v2539 = vadd.f32 %v2520, %v2538
        %v2540 = vpop.f32.mrf.mxu0
        %v2541 = vadd.f32 %v2522, %v2540
        %2542 = vmatmul.bf16.gmra.mxu0 %v2383
        %v2543 = vpop.f32.mrf.mxu0
        %v2544 = vadd.f32 %v2525, %v2543
        %v2545 = vpop.f32.mrf.mxu0
        %v2546 = vadd.f32 %v2527, %v2545
        %2547 = vdwg.mxu0
        %2548 = vmatpush.bf16.msra.mxu0 %v2203
        %2549 = vmatpush.bf16.msra.mxu0 %v2201
        %2550 = vmatpush.bf16.msra.mxu0 %v2199
        %2551 = vmatpush.bf16.msra.mxu0 %v2197
        %2552 = vmatpush.bf16.msra.mxu0 %v2163
        %2553 = vmatpush.bf16.msra.mxu0 %v2161
        %2554 = vmatpush.bf16.msra.mxu0 %v2159
        %2555 = vmatpush.bf16.msra.mxu0 %v2157
        %2556 = vmatmul.bf16.gmra.mxu0 %v2379
        %v2557 = vpop.f32.mrf.mxu0
        %v2558 = vadd.f32 %v2539, %v2557
        %v2559 = vpop.f32.mrf.mxu0
        %v2560 = vadd.f32 %v2541, %v2559
        %2561 = vmatmul.bf16.gmra.mxu0 %v2384
        %v2562 = vpop.f32.mrf.mxu0
        %v2563 = vadd.f32 %v2544, %v2562
        %v2564 = vpop.f32.mrf.mxu0
        %v2565 = vadd.f32 %v2546, %v2564
        %2566 = vdwg.mxu0
        %2567 = vmatpush.bf16.msra.mxu0 %v2283
        %2568 = vmatpush.bf16.msra.mxu0 %v2281
        %2569 = vmatpush.bf16.msra.mxu0 %v2279
        %2570 = vmatpush.bf16.msra.mxu0 %v2277
        %2571 = vmatpush.bf16.msra.mxu0 %v2243
        %2572 = vmatpush.bf16.msra.mxu0 %v2241
        %2573 = vmatpush.bf16.msra.mxu0 %v2239
        %2574 = vmatpush.bf16.msra.mxu0 %v2237
        %2575 = vmatmul.bf16.gmra.mxu0 %v2380
        %v2576 = vpop.f32.mrf.mxu0
        %v2577 = vadd.f32 %v2558, %v2576
        %v2578 = vpop.f32.mrf.mxu0
        %v2579 = vadd.f32 %v2560, %v2578
        %2580 = vmatmul.bf16.gmra.mxu0 %v2385
        %v2581 = vpop.f32.mrf.mxu0
        %v2582 = vadd.f32 %v2563, %v2581
        %v2583 = vpop.f32.mrf.mxu0
        %v2584 = vadd.f32 %v2565, %v2583
        %2585 = vdwg.mxu0
        %v2586 = vld [vmem:[%s5] sm:$0xff]
        %v2587 = vld [vmem:[%s5 + $0x8] sm:$0xff]
        %v2588 = vld [vmem:[%s5 + $0x10] sm:$0xff]
        %v2589 = vld [vmem:[%s5 + $0x18] sm:$0xff]
        %2591 = vset.pattern.permute.xlu0 0
        %2592 = vperm.xlu0 %2591, %v2586
        %v2593 = vpop.permute.xlu0 %2592
        %2596 = vset.pattern.permute.xlu0 0
        %2597 = vperm.xlu0 %2596, %v2587
        %v2598 = vpop.permute.xlu0 %2597
        %2601 = vset.pattern.permute.xlu0 0
        %2602 = vperm.xlu0 %2601, %v2588
        %v2603 = vpop.permute.xlu0 %2602
        %2606 = vset.pattern.permute.xlu0 0
        %2607 = vperm.xlu0 %2606, %v2589
        %v2608 = vpop.permute.xlu0 %2607
        %v2610 = vadd.f32 %v2482, %v2593
        %v2611 = vadd.f32 %v2577, %v2593
        %v2612 = vadd.f32 %v2484, %v2598
        %v2613 = vadd.f32 %v2579, %v2598
        %v2614 = vadd.f32 %v2487, %v2603
        %v2615 = vadd.f32 %v2582, %v2603
        %v2616 = vadd.f32 %v2489, %v2608
        %v2617 = vadd.f32 %v2584, %v2608
        %2618 = vst [vmem:[%s396] sm:$0xff] %v2610
        %2619 = vst [vmem:[%s396 + $0x8] sm:$0xff] %v2611
        %2620 = vst [vmem:[%s396 + $0x10] sm:$0xff] %v2612
        %2621 = vst [vmem:[%s396 + $0x18] sm:$0xff] %v2613
        %2622 = vst [vmem:[%s396 + $0x20] sm:$0xff] %v2614
        %2623 = vst [vmem:[%s396 + $0x28] sm:$0xff] %v2615
        %2624 = vst [vmem:[%s396 + $0x30] sm:$0xff] %v2616
        %2625 = vst [vmem:[%s396 + $0x38] sm:$0xff] %v2617
        %s2626 = sand.u32 %s234, 1
        %s2627 = scalar_lea.sflag [#allocation4], %s2626
        %s2628 = sand.u32 %s234, 1
        %s2629 = smul.addr %s2628, 64
        %s2630 = scalar_lea.vmem [#allocation8], %s2629
        // Predicated region
        $region69: #{tpu_custom_call.1} parent=55 // pred_check
          %p2631 = pneg %p244
        $region70: #{tpu_custom_call.1} parent=55 // pred_check_branch
          %2633 = sbr.rel (%p2631) target = $region72
        $region71: #{tpu_custom_call.1} parent=55 // pred_region
          %2635 = vsyncadd %s2627, 0
          %s2636 = smul.addr %s27, 8
          %s2637 = smul.addr %s2636, 8
          %s2638 = scalar_lea.hbm %s9, %s2637
          %s2639 = sshll.u32 %s2630, 4
          %s2640 = int_to_ptr.vmem [resolvable:$true] %s2639
          %s2641 = sshll.u32 %s2638, 4
          %s2642 = int_to_ptr.hbm [resolvable:$true] %s2641
          %2647 = dma.vmem_to_hbm [thread:$0]  %s2640, 1024, %s2642, %s2627, 256, 256, 16
        $region72: #{tpu_custom_call.1} parent=55 // pred_fallthru
          _
      $region56: #{tpu_custom_call.1} parent=5 // pred_fallthru
        _
      %p2648 = scmp.le.s32.totalorder 2, %s22
      // Predicated region
      $region73: #{tpu_custom_call.1} parent=5 // pred_check
        %p2649 = pneg %p2648
      $region74: #{tpu_custom_call.1} parent=5 // pred_check_branch
        %2651 = sbr.rel (%p2649) target = $region76
      $region75: #{tpu_custom_call.1} parent=5 // pred_region
        %s2652 = ssub.s32 %s22, 2
        // Predicated region
        $region77: #{tpu_custom_call.1} parent=75 // pred_check
          %p2653 = pneg %p250
        $region78: #{tpu_custom_call.1} parent=75 // pred_check_branch
          %2655 = sbr.rel (%p2653) target = $region80
        $region79: #{tpu_custom_call.1} parent=75 // pred_region
          %s2656 = sand.u32 %s235, 1
          %s2657 = scalar_lea.sflag [#allocation4], %s2656
          %s2658 = sand.u32 %s235, 1
          %s2659 = smul.addr %s2658, 64
          %s2660 = scalar_lea.vmem [#allocation8], %s2659
          %2662 = dma.done %s2657, 1024
        $region80: #{tpu_custom_call.1} parent=75 // pred_fallthru
          _
      $region76: #{tpu_custom_call.1} parent=5 // pred_fallthru
        _
    $region6: #{tpu_custom_call.1} parent=1 // loop_footer
      %s26 = sadd.s32 1, %s22
    $region7: #{tpu_custom_call.1} parent=1 // loop_footer_branch
      %21 = sbr.rel target = $region3
    $region8: #{tpu_custom_call.1} parent=1 // loop_exit
      _
    %2663 = vsyncpa [#allocation3], 1
    %s2664 = scalar_lea.sflag [#allocation3], 1
    %2665 = vsyncpa %s2664, 1
    %2666 = vsyncpa [#allocation6], 1
    %2667 = vsyncpa [#allocation4], 1
    %s2668 = scalar_lea.sflag [#allocation4], 1
    %2669 = vsyncpa %s2668, 1

</llo_original>
